<compile_context>
chip_gen: v6e
topology: v6e:2x2x1
jax: 0.10.0
libtpu: 0.0.40
codegen_flags: <defaults>
</compile_context>

<pallas_src>
import jax
import jax.numpy as jnp
from jax.experimental import pallas as pl
from jax.experimental.pallas import tpu as pltpu

TILE_N = 256                      # output row tile of A_norm (fills 2x256^2 MXU)
TILE_K = 256                      # contraction tile over adjacency columns
VMEM_LIMIT = 64 * 1024 * 1024     # 64 MiB scoped VMEM


# ------------------------- Stage 1: XW = X @ W_gcn -------------------------- #
def _xw_kernel(x_ref, wg_ref, xw_ref):
    xw_ref[...] = jnp.dot(
        x_ref[...], wg_ref[...], preferred_element_type=jnp.float32
    ).astype(xw_ref.dtype)


def precompute_xw(x_stack, wg, *, tile_n=TILE_N):
    """x_stack: (2, N, F) bf16, wg: (F, H) bf16 -> (2, N, H) bf16."""
    v, n, f = x_stack.shape
    hid = wg.shape[1]
    assert n % tile_n == 0, "N must be a multiple of TILE_N"
    return pl.pallas_call(
        _xw_kernel,
        out_shape=jax.ShapeDtypeStruct((v, n, hid), jnp.bfloat16),
        grid=(v, n // tile_n),
        in_specs=[
            pl.BlockSpec((None, tile_n, f), lambda vi, j: (vi, j, 0)),
            pl.BlockSpec((f, hid),          lambda vi, j: (0, 0)),
        ],
        out_specs=pl.BlockSpec((None, tile_n, hid), lambda vi, j: (vi, j, 0)),
        compiler_params=pltpu.CompilerParams(
            dimension_semantics=("parallel", "parallel"),
            vmem_limit_bytes=VMEM_LIMIT,
        ),
    )(x_stack, wg)


# --------------- Stage 2: K-tiled A @ XW + fused PReLU + MLP ---------------- #
def _grace_kernel(alpha_ref,          # SMEM (1,)              f32   PReLU slope
                  a_ref,              # VMEM (TILE_N, TILE_K)  bf16  A_norm block (this view)
                  xw_ref,             # VMEM (TILE_K, HID)     bf16  X @ W_gcn slice (this view)
                  bg_ref,             # VMEM (1, HID)          f32
                  w1_ref, b1_ref,     # (HID, PROJ) bf16, (1, PROJ) f32
                  w2_ref, b2_ref,     # (PROJ, HID) bf16, (1, HID)  f32
                  z_ref,              # VMEM out (TILE_N, HID) f32
                  acc_ref):           # VMEM scratch (TILE_N, HID) f32, carried over k
    k = pl.program_id(2)

    @pl.when(k == 0)
    def _():
        acc_ref[...] = jnp.zeros_like(acc_ref)

    # GCNConv aggregation: accumulate A_block @ XW_slice in f32.
    acc_ref[...] += jnp.dot(a_ref[...], xw_ref[...],
                            preferred_element_type=jnp.float32)

    @pl.when(k == pl.num_programs(2) - 1)
    def _():
        # bias + PReLU epilogue (single VPU pass over the f32 accumulator)
        h = acc_ref[...] + bg_ref[...]
        alpha = alpha_ref[0]                       # shared PReLU slope (scalar from SMEM)
        h = jnp.where(h >= 0.0, h, alpha * h)
        # encoder dropout = 0.0 -> no-op
        # Decoder MLP: Linear -> ReLU -> (dropout=0) -> Linear.
        p = jnp.dot(h.astype(w1_ref.dtype), w1_ref[...],
                    preferred_element_type=jnp.float32) + b1_ref[...]
        p = jnp.maximum(p, 0.0)
        z = jnp.dot(p.astype(w2_ref.dtype), w2_ref[...],
                    preferred_element_type=jnp.float32) + b2_ref[...]
        z_ref[...] = z.astype(z_ref.dtype)


def grace_views(a_stack, xw_stack, params, *, tile_n=TILE_N, tile_k=TILE_K):
    """Run GCN aggregation + PReLU + projection MLP for BOTH views in one gridded call.

    a_stack:  (2, N, N) bf16 dense normalized adjacencies
    xw_stack: (2, N, H) bf16 precomputed X @ W_gcn per view
    returns:  (2, N, H) f32 projections
    """
    v, n, _ = a_stack.shape
    hid = xw_stack.shape[-1]
    proj = params["w1"].shape[1]
    assert n % tile_n == 0 and n % tile_k == 0, "N must be a multiple of the tiles"

    grid = (v, n // tile_n, n // tile_k)
    smem = pl.BlockSpec(memory_space=pltpu.MemorySpace.SMEM)

    in_specs = [
        smem,                                                              # alpha (SMEM scalar)
        pl.BlockSpec((None, tile_n, tile_k), lambda vi, j, k: (vi, j, k)), # A block (streamed)
        pl.BlockSpec((None, tile_k, hid),    lambda vi, j, k: (vi, k, 0)), # XW slice (streamed)
        pl.BlockSpec((1, hid),               lambda vi, j, k: (0, 0)),     # b_gcn (resident)
        pl.BlockSpec((hid, proj),            lambda vi, j, k: (0, 0)),     # W1
        pl.BlockSpec((1, proj),              lambda vi, j, k: (0, 0)),     # b1
        pl.BlockSpec((proj, hid),            lambda vi, j, k: (0, 0)),     # W2
        pl.BlockSpec((1, hid),               lambda vi, j, k: (0, 0)),     # b2
    ]
    out_spec = pl.BlockSpec((None, tile_n, hid), lambda vi, j, k: (vi, j, 0))

    return pl.pallas_call(
        _grace_kernel,
        out_shape=jax.ShapeDtypeStruct((v, n, hid), jnp.float32),
        grid=grid,
        in_specs=in_specs,
        out_specs=out_spec,
        scratch_shapes=[pltpu.VMEM((tile_n, hid), jnp.float32)],   # f32 accumulator over k
        compiler_params=pltpu.CompilerParams(
            # view & row-tile axes independent -> both parallel (megacore on v7x);
            # k carries the accumulator -> arbitrary.
            dimension_semantics=("parallel", "parallel", "arbitrary"),
            vmem_limit_bytes=VMEM_LIMIT,
        ),
    )(params["alpha"], a_stack, xw_stack,
      params["bg"], params["w1"], params["b1"], params["w2"], params["b2"])


# ------------------------------- JAX glue ---------------------------------- #
def mask_feature(key, x, p):
    """Column feature masking (PyG mask_feature, mode='col'); returns bf16."""
    f = x.shape[1]
    keep = jax.random.bernoulli(key, 1.0 - p, (1, f)).astype(x.dtype)
    return (x * keep).astype(jnp.bfloat16)


def build_norm_adj(edge_index, keep_mask, num_nodes):
    """Dense D^-1/2 (A + I) D^-1/2 with A[dst, src] accumulated by scatter-add
    (duplicate edges sum, matching PyG's gcn_norm); returns bf16 directly."""
    src, dst = edge_index[0], edge_index[1]
    w = keep_mask.astype(jnp.float32)
    a = jnp.zeros((num_nodes, num_nodes), jnp.float32)
    a = a.at[dst, src].add(w)                                   # scatter-add
    a = a + jnp.eye(num_nodes, dtype=jnp.float32)               # add self loops (weight 1)
    deg = a.sum(axis=1)                                         # dst degree
    dinv = jnp.where(deg > 0, jax.lax.rsqrt(deg), 0.0)
    return (dinv[:, None] * a * dinv[None, :]).astype(jnp.bfloat16)


def glorot(key, shape):
    fan_in, fan_out = shape
    lim = jnp.sqrt(6.0 / (fan_in + fan_out))
    return jax.random.uniform(key, shape, jnp.float32, -lim, lim)


def init_params(key, in_channels, hid, proj):
    k1, k2, k3 = jax.random.split(key, 3)
    return {
        # GCNConv(in_channels, hid, bias=True)
        "wg": glorot(k1, (in_channels, hid)).astype(jnp.bfloat16),
        "bg": jnp.zeros((1, hid), jnp.float32),
        # PReLU(): single shared parameter, PyTorch default init 0.25
        "alpha": jnp.full((1,), 0.25, jnp.float32),
        # decoder MLP(hid, hid, [proj]): Linear(hid, proj) -> ReLU -> Linear(proj, hid)
        "w1": glorot(k2, (hid, proj)).astype(jnp.bfloat16),
        "b1": jnp.zeros((1, proj), jnp.float32),
        "w2": glorot(k3, (proj, hid)).astype(jnp.bfloat16),
        "b2": jnp.zeros((1, hid), jnp.float32),
    }


def grace_forward(key, x, edge_index, params,
                  drop_edge1=0.8, drop_edge2=0.7,
                  drop_feat1=0.4, drop_feat2=0.3):
    n = x.shape[0]
    e = edge_index.shape[1]
    ke1, ke2, kf1, kf2 = jax.random.split(key, 4)

    mask1 = jax.random.bernoulli(ke1, 1.0 - drop_edge1, (e,))
    mask2 = jax.random.bernoulli(ke2, 1.0 - drop_edge2, (e,))
    x1 = mask_feature(kf1, x, drop_feat1)
    x2 = mask_feature(kf2, x, drop_feat2)

    a_stack = jnp.stack([build_norm_adj(edge_index, mask1, n),
                         build_norm_adj(edge_index, mask2, n)])        # (2, N, N) bf16
    x_stack = jnp.stack([x1, x2])                                      # (2, N, F) bf16

    xw_stack = precompute_xw(x_stack, params["wg"])                    # (2, N, H) bf16
    z = grace_views(a_stack, xw_stack, params)                         # (2, N, H) f32
    return z[0], z[1], a_stack, x_stack


def _reference_view(a_bf16, x_bf16, params):
    """Pure-JAX reference replicating the kernel's cast points (bf16 matmuls, f32 accum)."""
    xw = jnp.dot(x_bf16, params["wg"],
                 preferred_element_type=jnp.float32).astype(jnp.bfloat16)
    h = jnp.dot(a_bf16, xw, preferred_element_type=jnp.float32) + params["bg"]
    alpha = params["alpha"][0]
    h = jnp.where(h >= 0.0, h, alpha * h)
    p = jnp.dot(h.astype(jnp.bfloat16), params["w1"],
                preferred_element_type=jnp.float32) + params["b1"]
    p = jnp.maximum(p, 0.0)
    return jnp.dot(p.astype(jnp.bfloat16), params["w2"],
                   preferred_element_type=jnp.float32) + params["b2"]


# --------------------------------- main ------------------------------------ #
if __name__ == "__main__":
    key = jax.random.PRNGKey(0)
    k_x, k_e1, k_e2, k_p, k_fwd = jax.random.split(key, 5)

    N = 512       # nodes (multiple of TILE_N=TILE_K=256 -> exercises K-tiling: grid (2,2,2))
    F_IN = 128    # in_channels (lane-dense)
    HID = 128     # hids=[128]          (module default)
    PROJ = 128    # project_hids=[128]  (module default)
    E = 2048      # directed edges

    x = jax.random.normal(k_x, (N, F_IN), jnp.float32)
    src = jax.random.randint(k_e1, (E,), 0, N)
    off = jax.random.randint(k_e2, (E,), 1, N)      # avoid self loops
    dst = (src + off) % N
    edge_index = jnp.stack([src, dst], axis=0).astype(jnp.int32)

    params = init_params(k_p, F_IN, HID, PROJ)

    fwd = jax.jit(grace_forward)
    z1, z2, a_stack, x_stack = fwd(k_fwd, x, edge_index, params)
    jax.block_until_ready((z1, z2))

    assert z1.shape == (N, HID) and z2.shape == (N, HID)
    assert bool(jnp.isfinite(z1).all()) and bool(jnp.isfinite(z2).all())

    # Numerical check against a pure-JAX reference with identical precision choices.
    r1 = _reference_view(a_stack[0], x_stack[0], params)
    r2 = _reference_view(a_stack[1], x_stack[1], params)
    assert jnp.allclose(z1, r1, rtol=5e-2, atol=5e-2)
    assert jnp.allclose(z2, r2, rtol=5e-2, atol=5e-2)

    print("KERNEL_OK")
</pallas_src>

<mosaic_0001>
module attributes {stable_mosaic.version = 11 : i64} {
  func.func private @main(%arg0: i32) attributes {dimension_semantics = [#tpu.dimension_semantics<core_parallel>], iteration_bounds = array<i64: 2>, tpu.core_type = #tpu.core_type<sc_scalar_subcore>, window_params = []} {
    return
  }
}

module attributes {stable_mosaic.version = 11 : i64} {
  func.func private @main(%arg0: i32) attributes {dimension_semantics = [#tpu.dimension_semantics<core_parallel>], iteration_bounds = array<i64: 2>, tpu.core_type = #tpu.core_type<sc_scalar_subcore>, window_params = []} {
    return
  }
}

module attributes {stable_mosaic.version = 11 : i64} {
  func.func @_xw_kernel(%arg0: i32, %arg1: i32, %arg2: memref<1x256x128xbf16, #tpu.memory_space<vmem>>, %arg3: memref<128x128xbf16, #tpu.memory_space<vmem>>, %arg4: memref<1x256x128xbf16, #tpu.memory_space<vmem>>) attributes {dimension_semantics = [#tpu.dimension_semantics<parallel>, #tpu.dimension_semantics<parallel>], iteration_bounds = array<i64: 2, 2>, scalar_prefetch = 0 : i64, scratch_operands = 0 : i64, tpu.core_type = #tpu.core_type<tc>, window_params = [{transform_indices = @transform_0, window_bounds = array<i64: 1, 256, 128>}, {pipeline_mode = #tpu.pipeline_mode<synchronous>, transform_indices = @transform_1, window_bounds = array<i64: 128, 128>}, {transform_indices = @transform_2, window_bounds = array<i64: 1, 256, 128>}]} {
    %c0 = arith.constant 0 : index
    %c0_0 = arith.constant 0 : index
    %c0_1 = arith.constant 0 : index
    %0 = vector.load %arg2[%c0, %c0_0, %c0_1] : memref<1x256x128xbf16, #tpu.memory_space<vmem>>, vector<1x256x128xbf16>
    %1 = vector.shape_cast %0 : vector<1x256x128xbf16> to vector<256x128xbf16>
    %c0_2 = arith.constant 0 : index
    %c0_3 = arith.constant 0 : index
    %2 = vector.load %arg3[%c0_2, %c0_3] : memref<128x128xbf16, #tpu.memory_space<vmem>>, vector<128x128xbf16>
    %cst = arith.constant dense<0.000000e+00> : vector<256x128xf32>
    %3 = tpu.matmul %1, %2, %cst {dimension_numbers = #tpu.dot_dimension_numbers<[1], [0], [0], [1], [0, 0, 1, 1], [], []>} : vector<256x128xbf16>, vector<128x128xbf16>, vector<256x128xf32> -> vector<256x128xf32>
    %4 = arith.truncf %3 : vector<256x128xf32> to vector<256x128xbf16>
    %c0_4 = arith.constant 0 : index
    %c0_5 = arith.constant 0 : index
    %c0_6 = arith.constant 0 : index
    %5 = vector.load %arg4[%c0_4, %c0_5, %c0_6] : memref<1x256x128xbf16, #tpu.memory_space<vmem>>, vector<1x256x128xbf16>
    %6 = vector.shape_cast %5 : vector<1x256x128xbf16> to vector<256x128xbf16>
    %7 = vector.shape_cast %4 : vector<256x128xbf16> to vector<1x256x128xbf16>
    tpu.vector_store %arg4[%c0_4, %c0_5, %c0_6], %7 {strides = array<i32>} : memref<1x256x128xbf16, #tpu.memory_space<vmem>>, vector<1x256x128xbf16>,
    return
  }
  func.func @transform_0(%arg0: i32, %arg1: i32) -> (i32, i32, i32) {
    %c0_i32 = arith.constant 0 : i32
    %c0_i32_0 = arith.constant 0 : i32
    return %arg0, %arg1, %c0_i32 : i32, i32, i32
  }
  func.func @transform_1(%arg0: i32, %arg1: i32) -> (i32, i32) {
    %c0_i32 = arith.constant 0 : i32
    %c0_i32_0 = arith.constant 0 : i32
    %c0_i32_1 = arith.constant 0 : i32
    return %c0_i32, %c0_i32_0 : i32, i32
  }
  func.func @transform_2(%arg0: i32, %arg1: i32) -> (i32, i32, i32) {
    %c0_i32 = arith.constant 0 : i32
    %c0_i32_0 = arith.constant 0 : i32
    return %arg0, %arg1, %c0_i32 : i32, i32, i32
  }
}

module attributes {stable_mosaic.version = 11 : i64} {
  func.func @_grace_kernel(%arg0: i32, %arg1: i32, %arg2: i32, %arg3: memref<1xf32, #tpu.memory_space<smem>>, %arg4: memref<1x256x256xbf16, #tpu.memory_space<vmem>>, %arg5: memref<1x256x128xbf16, #tpu.memory_space<vmem>>, %arg6: memref<1x128xf32, #tpu.memory_space<vmem>>, %arg7: memref<128x128xbf16, #tpu.memory_space<vmem>>, %arg8: memref<1x128xf32, #tpu.memory_space<vmem>>, %arg9: memref<128x128xbf16, #tpu.memory_space<vmem>>, %arg10: memref<1x128xf32, #tpu.memory_space<vmem>>, %arg11: memref<1x256x128xf32, #tpu.memory_space<vmem>>, %arg12: memref<256x128xf32, #tpu.memory_space<vmem>>) attributes {dimension_semantics = [#tpu.dimension_semantics<parallel>, #tpu.dimension_semantics<parallel>, #tpu.dimension_semantics<arbitrary>], iteration_bounds = array<i64: 2, 2, 2>, scalar_prefetch = 0 : i64, scratch_operands = 1 : i64, tpu.core_type = #tpu.core_type<tc>, window_params = [{transform_indices = @transform_0, window_bounds = array<i64: 1>}, {transform_indices = @transform_1, window_bounds = array<i64: 1, 256, 256>}, {transform_indices = @transform_2, window_bounds = array<i64: 1, 256, 128>}, {pipeline_mode = #tpu.pipeline_mode<synchronous>, transform_indices = @transform_3, window_bounds = array<i64: 1, 128>}, {pipeline_mode = #tpu.pipeline_mode<synchronous>, transform_indices = @transform_4, window_bounds = array<i64: 128, 128>}, {pipeline_mode = #tpu.pipeline_mode<synchronous>, transform_indices = @transform_5, window_bounds = array<i64: 1, 128>}, {pipeline_mode = #tpu.pipeline_mode<synchronous>, transform_indices = @transform_6, window_bounds = array<i64: 128, 128>}, {pipeline_mode = #tpu.pipeline_mode<synchronous>, transform_indices = @transform_7, window_bounds = array<i64: 1, 128>}, {transform_indices = @transform_8, window_bounds = array<i64: 1, 256, 128>}]} {
    %c0_i32 = arith.constant 0 : i32
    %0 = arith.cmpi eq, %arg2, %c0_i32 : i32
    %1 = arith.extui %0 : i1 to i32
    %c0_i32_0 = arith.constant 0 : i32
    %2 = arith.cmpi ne, %1, %c0_i32_0 : i32
    scf.if %2 {
      %cst_11 = arith.constant 0.000000e+00 : f32
      %14 = vector.broadcast %cst_11 : f32 to vector<256x128xf32>
      %c0_12 = arith.constant 0 : index
      %c0_13 = arith.constant 0 : index
      %15 = vector.load %arg12[%c0_12, %c0_13] : memref<256x128xf32, #tpu.memory_space<vmem>>, vector<256x128xf32>
      tpu.vector_store %arg12[%c0_12, %c0_13], %14 {strides = array<i32>} : memref<256x128xf32, #tpu.memory_space<vmem>>, vector<256x128xf32>,
    } else {
    }
    %c0 = arith.constant 0 : index
    %c0_1 = arith.constant 0 : index
    %3 = vector.load %arg12[%c0, %c0_1] : memref<256x128xf32, #tpu.memory_space<vmem>>, vector<256x128xf32>
    %c0_2 = arith.constant 0 : index
    %c0_3 = arith.constant 0 : index
    %c0_4 = arith.constant 0 : index
    %4 = vector.load %arg4[%c0_2, %c0_3, %c0_4] : memref<1x256x256xbf16, #tpu.memory_space<vmem>>, vector<1x256x256xbf16>
    %5 = vector.shape_cast %4 : vector<1x256x256xbf16> to vector<256x256xbf16>
    %c0_5 = arith.constant 0 : index
    %c0_6 = arith.constant 0 : index
    %c0_7 = arith.constant 0 : index
    %6 = vector.load %arg5[%c0_5, %c0_6, %c0_7] : memref<1x256x128xbf16, #tpu.memory_space<vmem>>, vector<1x256x128xbf16>
    %7 = vector.shape_cast %6 : vector<1x256x128xbf16> to vector<256x128xbf16>
    %cst = arith.constant dense<0.000000e+00> : vector<256x128xf32>
    %8 = tpu.matmul %5, %7, %cst {dimension_numbers = #tpu.dot_dimension_numbers<[1], [0], [0], [1], [0, 0, 1, 1], [], []>} : vector<256x256xbf16>, vector<256x128xbf16>, vector<256x128xf32> -> vector<256x128xf32>
    %9 = arith.addf %3, %8 : vector<256x128xf32>
    %c0_8 = arith.constant 0 : index
    %c0_9 = arith.constant 0 : index
    %10 = vector.load %arg12[%c0_8, %c0_9] : memref<256x128xf32, #tpu.memory_space<vmem>>, vector<256x128xf32>
    tpu.vector_store %arg12[%c0_8, %c0_9], %9 {strides = array<i32>} : memref<256x128xf32, #tpu.memory_space<vmem>>, vector<256x128xf32>,
    %c1_i32 = arith.constant 1 : i32
    %11 = arith.cmpi eq, %arg2, %c1_i32 : i32
    %12 = arith.extui %11 : i1 to i32
    %c0_i32_10 = arith.constant 0 : i32
    %13 = arith.cmpi ne, %12, %c0_i32_10 : i32
    scf.if %13 {
      %c0_11 = arith.constant 0 : index
      %c0_12 = arith.constant 0 : index
      %14 = vector.load %arg12[%c0_11, %c0_12] : memref<256x128xf32, #tpu.memory_space<vmem>>, vector<256x128xf32>
      %c0_13 = arith.constant 0 : index
      %c0_14 = arith.constant 0 : index
      %15 = vector.load %arg6[%c0_13, %c0_14] : memref<1x128xf32, #tpu.memory_space<vmem>>, vector<1x128xf32>
      %16 = vector.broadcast %15 : vector<1x128xf32> to vector<256x128xf32>
      %17 = arith.addf %14, %16 : vector<256x128xf32>
      %c0_15 = arith.constant 0 : index
      %18 = memref.load %arg3[%c0_15] : memref<1xf32, #tpu.memory_space<smem>>
      %cst_16 = arith.constant 0.000000e+00 : f32
      %19 = vector.broadcast %cst_16 : f32 to vector<256x128xf32>
      %20 = arith.cmpf oge, %17, %19 : vector<256x128xf32>
      %21 = vector.broadcast %18 : f32 to vector<256x128xf32>
      %22 = arith.mulf %21, %17 : vector<256x128xf32>
      %23 = arith.select %20, %17, %22 : vector<256x128xi1>, vector<256x128xf32>
      %24 = arith.truncf %23 : vector<256x128xf32> to vector<256x128xbf16>
      %c0_17 = arith.constant 0 : index
      %c0_18 = arith.constant 0 : index
      %25 = vector.load %arg7[%c0_17, %c0_18] : memref<128x128xbf16, #tpu.memory_space<vmem>>, vector<128x128xbf16>
      %cst_19 = arith.constant dense<0.000000e+00> : vector<256x128xf32>
      %26 = tpu.matmul %24, %25, %cst_19 {dimension_numbers = #tpu.dot_dimension_numbers<[1], [0], [0], [1], [0, 0, 1, 1], [], []>} : vector<256x128xbf16>, vector<128x128xbf16>, vector<256x128xf32> -> vector<256x128xf32>
      %c0_20 = arith.constant 0 : index
      %c0_21 = arith.constant 0 : index
      %27 = vector.load %arg8[%c0_20, %c0_21] : memref<1x128xf32, #tpu.memory_space<vmem>>, vector<1x128xf32>
      %28 = vector.broadcast %27 : vector<1x128xf32> to vector<256x128xf32>
      %29 = arith.addf %26, %28 : vector<256x128xf32>
      %cst_22 = arith.constant 0.000000e+00 : f32
      %30 = vector.broadcast %cst_22 : f32 to vector<256x128xf32>
      %31 = arith.maximumf %29, %30 : vector<256x128xf32>
      %32 = arith.truncf %31 : vector<256x128xf32> to vector<256x128xbf16>
      %c0_23 = arith.constant 0 : index
      %c0_24 = arith.constant 0 : index
      %33 = vector.load %arg9[%c0_23, %c0_24] : memref<128x128xbf16, #tpu.memory_space<vmem>>, vector<128x128xbf16>
      %cst_25 = arith.constant dense<0.000000e+00> : vector<256x128xf32>
      %34 = tpu.matmul %32, %33, %cst_25 {dimension_numbers = #tpu.dot_dimension_numbers<[1], [0], [0], [1], [0, 0, 1, 1], [], []>} : vector<256x128xbf16>, vector<128x128xbf16>, vector<256x128xf32> -> vector<256x128xf32>
      %c0_26 = arith.constant 0 : index
      %c0_27 = arith.constant 0 : index
      %35 = vector.load %arg10[%c0_26, %c0_27] : memref<1x128xf32, #tpu.memory_space<vmem>>, vector<1x128xf32>
      %36 = vector.broadcast %35 : vector<1x128xf32> to vector<256x128xf32>
      %37 = arith.addf %34, %36 : vector<256x128xf32>
      %c0_28 = arith.constant 0 : index
      %c0_29 = arith.constant 0 : index
      %c0_30 = arith.constant 0 : index
      %38 = vector.load %arg11[%c0_28, %c0_29, %c0_30] : memref<1x256x128xf32, #tpu.memory_space<vmem>>, vector<1x256x128xf32>
      %39 = vector.shape_cast %38 : vector<1x256x128xf32> to vector<256x128xf32>
      %40 = vector.shape_cast %37 : vector<256x128xf32> to vector<1x256x128xf32>
      tpu.vector_store %arg11[%c0_28, %c0_29, %c0_30], %40 {strides = array<i32>} : memref<1x256x128xf32, #tpu.memory_space<vmem>>, vector<1x256x128xf32>,
    } else {
    }
    return
  }
  func.func @transform_0(%arg0: i32, %arg1: i32, %arg2: i32) -> i32 {
    %c0_i32 = arith.constant 0 : i32
    %c0_i32_0 = arith.constant 0 : i32
    return %c0_i32 : i32
  }
  func.func @transform_1(%arg0: i32, %arg1: i32, %arg2: i32) -> (i32, i32, i32) {
    %c0_i32 = arith.constant 0 : i32
    return %arg0, %arg1, %arg2 : i32, i32, i32
  }
  func.func @transform_2(%arg0: i32, %arg1: i32, %arg2: i32) -> (i32, i32, i32) {
    %c0_i32 = arith.constant 0 : i32
    %c0_i32_0 = arith.constant 0 : i32
    return %arg0, %arg2, %c0_i32 : i32, i32, i32
  }
  func.func @transform_3(%arg0: i32, %arg1: i32, %arg2: i32) -> (i32, i32) {
    %c0_i32 = arith.constant 0 : i32
    %c0_i32_0 = arith.constant 0 : i32
    %c0_i32_1 = arith.constant 0 : i32
    return %c0_i32, %c0_i32_0 : i32, i32
  }
  func.func @transform_4(%arg0: i32, %arg1: i32, %arg2: i32) -> (i32, i32) {
    %c0_i32 = arith.constant 0 : i32
    %c0_i32_0 = arith.constant 0 : i32
    %c0_i32_1 = arith.constant 0 : i32
    return %c0_i32, %c0_i32_0 : i32, i32
  }
  func.func @transform_5(%arg0: i32, %arg1: i32, %arg2: i32) -> (i32, i32) {
    %c0_i32 = arith.constant 0 : i32
    %c0_i32_0 = arith.constant 0 : i32
    %c0_i32_1 = arith.constant 0 : i32
    return %c0_i32, %c0_i32_0 : i32, i32
  }
  func.func @transform_6(%arg0: i32, %arg1: i32, %arg2: i32) -> (i32, i32) {
    %c0_i32 = arith.constant 0 : i32
    %c0_i32_0 = arith.constant 0 : i32
    %c0_i32_1 = arith.constant 0 : i32
    return %c0_i32, %c0_i32_0 : i32, i32
  }
  func.func @transform_7(%arg0: i32, %arg1: i32, %arg2: i32) -> (i32, i32) {
    %c0_i32 = arith.constant 0 : i32
    %c0_i32_0 = arith.constant 0 : i32
    %c0_i32_1 = arith.constant 0 : i32
    return %c0_i32, %c0_i32_0 : i32, i32
  }
  func.func @transform_8(%arg0: i32, %arg1: i32, %arg2: i32) -> (i32, i32, i32) {
    %c0_i32 = arith.constant 0 : i32
    %c0_i32_0 = arith.constant 0 : i32
    return %arg0, %arg1, %c0_i32 : i32, i32, i32
  }
}

</mosaic_0001>

<llo_original>
// kernel: grace_forward.4
$region0: #{grace_forward.4}
  #allocation0 [shape = 'u32[]', space=smem, size = 0x4, offset = 0x4, fixed_abs, tag = 'smem constant byte address 0x4 - core index']
  #allocation1 [shape = 'u32[144,128]{1,0:T(1,128)}', space=vmem, size = 0x12000, scoped, tag = 'internal scratch']
  %s0 = inlined_call_operand.vmem [shape: bf16[2,512,128], index: 0, kind: input, shape index: {}]
  %s1 = inlined_call_operand.vmem [shape: bf16[128,128], index: 1, kind: input, shape index: {}]
  %s2 = inlined_call_operand.vmem [shape: bf16[2,512,128], index: 2, kind: output, shape index: {}]
  %s3 = sld [smem:[#allocation0]]
  $region41: #{grace_forward.4} parent=0
    _
  %s5 = ssub.s32 1, %s3
  %s6 = scalar_select 0, %s5, %s3
  loop: start=0, step=1, limit=6
  $region2: #{grace_forward.4} parent=0 // loop_pre_header
    _
  $region3: #{grace_forward.4} parent=0 // loop_header
    %s8 = sphi 0, %s12
    %p9 = scmp.ge.s32.totalorder %s8, 6
    %s15 = sphi 0, %s27
    %s16 = sphi 0, %s23
    %s17 = sphi 0, %s15
    %s18 = sphi 0, %s16
    %s19 = sphi 0, %s17
    %s20 = sphi 0, %s18
    %s32 = sphi 0, %s34
    %s35 = sphi 0, %s32
    %s36 = sphi 0, %s35
    %s52 = sphi 0, %s36
    %s56 = sphi 0, %s56
    %s58 = sphi 0, %s56
    %s59 = sphi 0, %s58
    %s73 = sphi 0, %s59
    %s81 = sphi 0, %s83
    %s84 = sphi 0, %s81
    %s85 = sphi 0, %s84
    %s101 = sphi 0, %s85
  $region4: #{grace_forward.4} parent=0 // loop_header_branch
    %11 = sbr.rel (%p9) target = $region8
  $region5: #{grace_forward.4} parent=0 // loop_body
    %s13 = ssub.s32 %s8, 1
    %s14 = ssub.s32 %s8, 2
    %s21 = sadd.s32 1, %s16
    %p22 = scmp.ge.s32.totalorder %s21, 2
    %s23 = scalar_select %p22, 0, %s21
    %s24 = sadd.s32 1, %s15
    %s25 = scalar_select %p22, %s24, %s15
    %p26 = scmp.ge.s32.totalorder %s25, 2
    %s27 = scalar_select %p26, 0, %s25
    %s28 = ssub.s32 %s15, %s27
    %s29 = ssub.s32 %s16, %s23
    %s30 = sor.u32 %s28, %s29
    %p31 = scmp.eq.s32.totalorder %s30, 0
    %s33 = sadd.s32 %s32, 1
    %s34 = scalar_select %p31, %s32, %s33
    %p37 = pneg %p31
    %p38 = scmp.eq.s32.totalorder %s8, 3
    %p39 = por %p37, %p38
    %p40 = scmp.ne.s32.totalorder %s32, %s35
    %p41 = scmp.eq.s32.totalorder %s8, 0
    %p42 = por %p40, %p41
    %p43 = scmp.ne.s32.totalorder %s32, %s35
    %p44 = scmp.eq.s32.totalorder %s13, 3
    %p45 = por %p43, %p44
    %p46 = scmp.ne.s32.totalorder %s35, %s36
    %p47 = scmp.eq.s32.totalorder %s13, 0
    %p48 = por %p46, %p47
    %p49 = scmp.ne.s32.totalorder %s35, %s36
    %p50 = scmp.eq.s32.totalorder %s14, 3
    %p51 = por %p49, %p50
    %p53 = scmp.ne.s32.totalorder %s36, %s52
    %p54 = scmp.eq.s32.totalorder %s14, 0
    %p55 = por %p53, %p54
    %s57 = sadd.s32 %s56, 1
    %p60 = scmp.eq.s32.totalorder %s8, 3
    %p61 = scmp.ne.s32.totalorder %s56, %s58
    %p62 = scmp.eq.s32.totalorder %s8, 0
    %p63 = por %p61, %p62
    %p64 = scmp.ne.s32.totalorder %s56, %s58
    %p65 = scmp.eq.s32.totalorder %s13, 3
    %p66 = por %p64, %p65
    %p67 = scmp.ne.s32.totalorder %s58, %s59
    %p68 = scmp.eq.s32.totalorder %s13, 0
    %p69 = por %p67, %p68
    %p70 = scmp.ne.s32.totalorder %s58, %s59
    %p71 = scmp.eq.s32.totalorder %s14, 3
    %p72 = por %p70, %p71
    %p74 = scmp.ne.s32.totalorder %s59, %s73
    %p75 = scmp.eq.s32.totalorder %s14, 0
    %p76 = por %p74, %p75
    %s77 = ssub.s32 %s15, %s27
    %s78 = ssub.s32 %s16, %s23
    %s79 = sor.u32 %s77, %s78
    %p80 = scmp.eq.s32.totalorder %s79, 0
    %s82 = sadd.s32 %s81, 1
    %s83 = scalar_select %p80, %s81, %s82
    %p86 = pneg %p80
    %p87 = scmp.eq.s32.totalorder %s8, 3
    %p88 = por %p86, %p87
    %p89 = scmp.ne.s32.totalorder %s81, %s84
    %p90 = scmp.eq.s32.totalorder %s8, 0
    %p91 = por %p89, %p90
    %p92 = scmp.ne.s32.totalorder %s81, %s84
    %p93 = scmp.eq.s32.totalorder %s13, 3
    %p94 = por %p92, %p93
    %p95 = scmp.ne.s32.totalorder %s84, %s85
    %p96 = scmp.eq.s32.totalorder %s13, 0
    %p97 = por %p95, %p96
    %p98 = scmp.ne.s32.totalorder %s84, %s85
    %p99 = scmp.eq.s32.totalorder %s14, 3
    %p100 = por %p98, %p99
    %p102 = scmp.ne.s32.totalorder %s85, %s101
    %p103 = scmp.eq.s32.totalorder %s14, 0
    %p104 = por %p102, %p103
    %p105 = scmp.le.s32.totalorder 1, %s8
    %p106 = scmp.lt.s32.totalorder %s8, 5
    %p107 = pnand %p105, %p106
    %p108 = pneg %p107
    // Predicated region
    $region9: #{grace_forward.4} parent=5 // pred_check
      _
    $region10: #{grace_forward.4} parent=5 // pred_check_branch
      %110 = sbr.rel (%p107) target = $region12
    $region11: #{grace_forward.4} parent=5 // pred_region
      %s111 = ssub.s32 %s8, 1
      // Predicated region
      $region13: #{grace_forward.4} parent=11 // pred_check
        %p112 = pneg %p69
      $region14: #{grace_forward.4} parent=11 // pred_check_branch
        %114 = sbr.rel (%p112) target = $region16
      $region15: #{grace_forward.4} parent=11 // pred_region
        _
      $region16: #{grace_forward.4} parent=11 // pred_fallthru
        _
    $region12: #{grace_forward.4} parent=5 // pred_fallthru
      _
    %p115 = scmp.lt.s32.totalorder %s8, 4
    // Predicated region
    $region17: #{grace_forward.4} parent=5 // pred_check
      %p116 = pneg %p115
    $region18: #{grace_forward.4} parent=5 // pred_check_branch
      %118 = sbr.rel (%p116) target = $region20
    $region19: #{grace_forward.4} parent=5 // pred_region
      // Predicated region
      $region21: #{grace_forward.4} parent=19 // pred_check
        %p119 = pneg %p42
      $region22: #{grace_forward.4} parent=19 // pred_check_branch
        %121 = sbr.rel (%p119) target = $region24
      $region23: #{grace_forward.4} parent=19 // pred_region
        %s122 = smul.u32 32, %s16
        %p123 = scmp.lt.s32.totalorder %s15, 1
        %s124 = scalar_select %p123, %s15, 1
        %p125 = scmp.lt.s32.totalorder %s122, 63
        %s126 = scalar_select %p125, %s122, 63
        %s127 = smul.addr %s124, 64
        %s128 = sadd.s32 %s126, %s127
        %s129 = smul.addr %s128, 4
        %s130 = scalar_lea.vmem %s0, %s129
        %s131 = smul.u32 32, %s16
      $region24: #{grace_forward.4} parent=19 // pred_fallthru
        _
    $region20: #{grace_forward.4} parent=5 // pred_fallthru
      _
    %p132 = scmp.le.s32.totalorder 1, %s8
    %p133 = scmp.lt.s32.totalorder %s8, 5
    %p134 = pnand %p132, %p133
    %p135 = pneg %p134
    // Predicated region
    $region25: #{grace_forward.4} parent=5 // pred_check
      _
    $region26: #{grace_forward.4} parent=5 // pred_check_branch
      %137 = sbr.rel (%p134) target = $region28
    $region27: #{grace_forward.4} parent=5 // pred_region
      %s138 = ssub.s32 %s8, 1
      %s139 = smul.u32 32, %s18
      %p140 = scmp.lt.s32.totalorder %s17, 1
      %s141 = scalar_select %p140, %s17, 1
      %p142 = scmp.lt.s32.totalorder %s139, 63
      %s143 = scalar_select %p142, %s139, 63
      %s144 = smul.addr %s141, 64
      %s145 = sadd.s32 %s143, %s144
      %s146 = smul.addr %s145, 4
      %s147 = scalar_lea.vmem %s0, %s146
      %p148 = pneg %p48
      %p149 = pneg %p45
      %p150 = pneg %p69
      %p151 = pneg %p66
      %p152 = pneg %p97
      %p153 = pneg %p94
      %s154 = smul.u32 32, %s18
      %p155 = scmp.lt.s32.totalorder %s17, 1
      %s156 = scalar_select %p155, %s17, 1
      %p157 = scmp.lt.s32.totalorder %s154, 63
      %s158 = scalar_select %p157, %s154, 63
      %s159 = smul.addr %s156, 64
      %s160 = sadd.s32 %s158, %s159
      %s161 = smul.addr %s160, 4
      %s162 = scalar_lea.vmem %s2, %s161
      %s163 = smul.u32 32, %s18
      %p164 = scmp.lt.s32.totalorder %s17, 1
      %s165 = scalar_select %p164, %s17, 1
      %p166 = scmp.lt.s32.totalorder %s163, 63
      %s167 = scalar_select %p166, %s163, 63
      %s168 = smul.addr %s165, 64
      %s169 = sadd.s32 %s167, %s168
      %s170 = smul.addr %s169, 4
      %s171 = scalar_lea.vmem %s0, %s170
      %s172 = smul.u32 32, %s18
      %s173 = smul.u32 32, %s18
      %p174 = scmp.lt.s32.totalorder %s17, 1
      %s175 = scalar_select %p174, %s17, 1
      %p176 = scmp.lt.s32.totalorder %s173, 63
      %s177 = scalar_select %p176, %s173, 63
      %s178 = smul.addr %s175, 64
      %s179 = sadd.s32 %s177, %s178
      %s180 = smul.addr %s179, 4
      %s181 = scalar_lea.vmem %s2, %s180
      %s182 = smul.u32 32, %s18
      %v184 = vld [vmem:[%s171] sm:$0xf]
      %v185 = vld [vmem:[%s171 + $0x4] sm:$0xf]
      %v186 = vld [vmem:[%s171 + $0x8] sm:$0xf]
      %v187 = vld [vmem:[%s171 + $0xc] sm:$0xf]
      %v188 = vld [vmem:[%s171 + $0x10] sm:$0xf]
      %v189 = vld [vmem:[%s171 + $0x14] sm:$0xf]
      %v190 = vld [vmem:[%s171 + $0x18] sm:$0xf]
      %v191 = vld [vmem:[%s171 + $0x1c] sm:$0xf]
      %v192 = vld [vmem:[%s171 + $0x20] sm:$0xf]
      %v193 = vld [vmem:[%s171 + $0x24] sm:$0xf]
      %v194 = vld [vmem:[%s171 + $0x28] sm:$0xf]
      %v195 = vld [vmem:[%s171 + $0x2c] sm:$0xf]
      %v196 = vld [vmem:[%s171 + $0x30] sm:$0xf]
      %v197 = vld [vmem:[%s171 + $0x34] sm:$0xf]
      %v198 = vld [vmem:[%s171 + $0x38] sm:$0xf]
      %v199 = vld [vmem:[%s171 + $0x3c] sm:$0xf]
      %v200 = vld [vmem:[%s171 + $0x40] sm:$0xf]
      %v201 = vld [vmem:[%s171 + $0x44] sm:$0xf]
      %v202 = vld [vmem:[%s171 + $0x48] sm:$0xf]
      %v203 = vld [vmem:[%s171 + $0x4c] sm:$0xf]
      %v204 = vld [vmem:[%s171 + $0x50] sm:$0xf]
      %v205 = vld [vmem:[%s171 + $0x54] sm:$0xf]
      %v206 = vld [vmem:[%s171 + $0x58] sm:$0xf]
      %v207 = vld [vmem:[%s171 + $0x5c] sm:$0xf]
      %v208 = vld [vmem:[%s171 + $0x60] sm:$0xf]
      %v209 = vld [vmem:[%s171 + $0x64] sm:$0xf]
      %v210 = vld [vmem:[%s171 + $0x68] sm:$0xf]
      %v211 = vld [vmem:[%s171 + $0x6c] sm:$0xf]
      %v212 = vld [vmem:[%s171 + $0x70] sm:$0xf]
      %v213 = vld [vmem:[%s171 + $0x74] sm:$0xf]
      %v214 = vld [vmem:[%s171 + $0x78] sm:$0xf]
      %v215 = vld [vmem:[%s171 + $0x7c] sm:$0xf]
      %v216 = vld [vmem:[%s1] sm:$0xf]
      %v217 = vld [vmem:[%s1 + $0x4] sm:$0xf]
      %v218 = vld [vmem:[%s1 + $0x8] sm:$0xf]
      %v219 = vld [vmem:[%s1 + $0xc] sm:$0xf]
      %v220 = vld [vmem:[%s1 + $0x10] sm:$0xf]
      %v221 = vld [vmem:[%s1 + $0x14] sm:$0xf]
      %v222 = vld [vmem:[%s1 + $0x18] sm:$0xf]
      %v223 = vld [vmem:[%s1 + $0x1c] sm:$0xf]
      %v224 = vld [vmem:[%s1 + $0x20] sm:$0xf]
      %v225 = vld [vmem:[%s1 + $0x24] sm:$0xf]
      %v226 = vld [vmem:[%s1 + $0x28] sm:$0xf]
      %v227 = vld [vmem:[%s1 + $0x2c] sm:$0xf]
      %v228 = vld [vmem:[%s1 + $0x30] sm:$0xf]
      %v229 = vld [vmem:[%s1 + $0x34] sm:$0xf]
      %v230 = vld [vmem:[%s1 + $0x38] sm:$0xf]
      %v231 = vld [vmem:[%s1 + $0x3c] sm:$0xf]
      %v264 = vunpack.c.l.b16 %v184
      %v265 = vunpack.c.l.b16 %v185
      %v266 = vunpack.c.l.b16 %v186
      %v267 = vunpack.c.l.b16 %v187
      %v268 = vunpack.c.l.b16 %v188
      %v269 = vunpack.c.l.b16 %v189
      %v270 = vunpack.c.l.b16 %v190
      %v271 = vunpack.c.l.b16 %v191
      %v272 = vunpack.c.l.b16 %v192
      %v273 = vunpack.c.l.b16 %v193
      %v274 = vunpack.c.l.b16 %v194
      %v275 = vunpack.c.l.b16 %v195
      %v276 = vunpack.c.l.b16 %v196
      %v277 = vunpack.c.l.b16 %v197
      %v278 = vunpack.c.l.b16 %v198
      %v279 = vunpack.c.l.b16 %v199
      %v280 = vunpack.c.l.b16 %v200
      %v281 = vunpack.c.l.b16 %v201
      %v282 = vunpack.c.l.b16 %v202
      %v283 = vunpack.c.l.b16 %v203
      %v284 = vunpack.c.l.b16 %v204
      %v285 = vunpack.c.l.b16 %v205
      %v286 = vunpack.c.l.b16 %v206
      %v287 = vunpack.c.l.b16 %v207
      %v288 = vunpack.c.l.b16 %v208
      %v289 = vunpack.c.l.b16 %v209
      %v290 = vunpack.c.l.b16 %v210
      %v291 = vunpack.c.l.b16 %v211
      %v292 = vunpack.c.l.b16 %v212
      %v293 = vunpack.c.l.b16 %v213
      %v294 = vunpack.c.l.b16 %v214
      %v295 = vunpack.c.l.b16 %v215
      %v296 = vpack.c.b16 %v265, %v264
      %v297 = vpack.c.b16 %v267, %v266
      %v298 = vpack.c.b16 %v269, %v268
      %v299 = vpack.c.b16 %v271, %v270
      %v300 = vpack.c.b16 %v273, %v272
      %v301 = vpack.c.b16 %v275, %v274
      %v302 = vpack.c.b16 %v277, %v276
      %v303 = vpack.c.b16 %v279, %v278
      %v304 = vpack.c.b16 %v281, %v280
      %v305 = vpack.c.b16 %v283, %v282
      %v306 = vpack.c.b16 %v285, %v284
      %v307 = vpack.c.b16 %v287, %v286
      %v308 = vpack.c.b16 %v289, %v288
      %v309 = vpack.c.b16 %v291, %v290
      %v310 = vpack.c.b16 %v293, %v292
      %v311 = vpack.c.b16 %v295, %v294
      %v344 = vunpack.c.l.b16 %v216
      %v345 = vunpack.c.l.b16 %v217
      %v346 = vunpack.c.l.b16 %v218
      %v347 = vunpack.c.l.b16 %v219
      %v348 = vunpack.c.l.b16 %v220
      %v349 = vunpack.c.l.b16 %v221
      %v350 = vunpack.c.l.b16 %v222
      %v351 = vunpack.c.l.b16 %v223
      %v352 = vunpack.c.l.b16 %v224
      %v353 = vunpack.c.l.b16 %v225
      %v354 = vunpack.c.l.b16 %v226
      %v355 = vunpack.c.l.b16 %v227
      %v356 = vunpack.c.l.b16 %v228
      %v357 = vunpack.c.l.b16 %v229
      %v358 = vunpack.c.l.b16 %v230
      %v359 = vunpack.c.l.b16 %v231
      %v360 = vpack.c.b16 %v345, %v344
      %v361 = vpack.c.b16 %v347, %v346
      %v362 = vpack.c.b16 %v349, %v348
      %v363 = vpack.c.b16 %v351, %v350
      %v364 = vpack.c.b16 %v353, %v352
      %v365 = vpack.c.b16 %v355, %v354
      %v366 = vpack.c.b16 %v357, %v356
      %v367 = vpack.c.b16 %v359, %v358
      %376 = vmatprep.subr.bf16.mxu0 0
      %377 = vmatpush1.bf16.msra.mxu0 %v367
      %378 = vmatprep.subr.bf16.mxu0 0
      %379 = vmatpush1.bf16.msra.mxu0 %v366
      %380 = vmatprep.subr.bf16.mxu0 0
      %381 = vmatpush1.bf16.msra.mxu0 %v365
      %382 = vmatprep.subr.bf16.mxu0 0
      %383 = vmatpush1.bf16.msra.mxu0 %v364
      %384 = vmatprep.subr.bf16.mxu0 0
      %385 = vmatpush1.bf16.msra.mxu0 %v363
      %386 = vmatprep.subr.bf16.mxu0 0
      %387 = vmatpush1.bf16.msra.mxu0 %v362
      %388 = vmatprep.subr.bf16.mxu0 0
      %389 = vmatpush1.bf16.msra.mxu0 %v361
      %390 = vmatprep.subr.bf16.mxu0 0
      %391 = vmatpush1.bf16.msra.mxu0 %v360
      %392 = vmatprep.subr.bf16.mxu0 0
      %393 = vmatpush2.bf16.msra.mxu0 0
      %394 = vmatprep.subr.bf16.mxu0 0
      %395 = vmatpush2.bf16.msra.mxu0 0
      %396 = vmatprep.subr.bf16.mxu0 0
      %397 = vmatpush2.bf16.msra.mxu0 0
      %398 = vmatprep.subr.bf16.mxu0 0
      %399 = vmatpush2.bf16.msra.mxu0 0
      %400 = vmatprep.subr.bf16.mxu0 0
      %401 = vmatpush2.bf16.msra.mxu0 0
      %402 = vmatprep.subr.bf16.mxu0 0
      %403 = vmatpush2.bf16.msra.mxu0 0
      %404 = vmatprep.subr.bf16.mxu0 0
      %405 = vmatpush2.bf16.msra.mxu0 0
      %406 = vmatprep.subr.bf16.mxu0 0
      %407 = vmatpush2.bf16.msra.mxu0 0
      %408 = vmatprep.mubr.bf16.mxu0 0
      %409 = vmatmul.mubr.bf16.gmra.mxu0 %v296
      %v410 = vpop.f32.mrf.mxu0
      %v411 = vadd.f32 0.0, %v410
      %v412 = vpop.f32.mrf.mxu0
      %v413 = vpop.f32.mrf.mxu0
      %v414 = vadd.f32 0.0, %v413
      %v415 = vpop.f32.mrf.mxu0
      %416 = vmatprep.mubr.bf16.mxu0 0
      %417 = vmatmul.mubr.bf16.gmra.mxu0 %v297
      %v418 = vpop.f32.mrf.mxu0
      %v419 = vadd.f32 0.0, %v418
      %v420 = vpop.f32.mrf.mxu0
      %v421 = vpop.f32.mrf.mxu0
      %v422 = vadd.f32 0.0, %v421
      %v423 = vpop.f32.mrf.mxu0
      %424 = vmatprep.mubr.bf16.mxu0 0
      %425 = vmatmul.mubr.bf16.gmra.mxu0 %v298
      %v426 = vpop.f32.mrf.mxu0
      %v427 = vadd.f32 0.0, %v426
      %v428 = vpop.f32.mrf.mxu0
      %v429 = vpop.f32.mrf.mxu0
      %v430 = vadd.f32 0.0, %v429
      %v431 = vpop.f32.mrf.mxu0
      %432 = vmatprep.mubr.bf16.mxu0 0
      %433 = vmatmul.mubr.bf16.gmra.mxu0 %v299
      %v434 = vpop.f32.mrf.mxu0
      %v435 = vadd.f32 0.0, %v434
      %v436 = vpop.f32.mrf.mxu0
      %v437 = vpop.f32.mrf.mxu0
      %v438 = vadd.f32 0.0, %v437
      %v439 = vpop.f32.mrf.mxu0
      %440 = vmatprep.mubr.bf16.mxu0 0
      %441 = vmatmul.mubr.bf16.gmra.mxu0 %v300
      %v442 = vpop.f32.mrf.mxu0
      %v443 = vadd.f32 0.0, %v442
      %v444 = vpop.f32.mrf.mxu0
      %v445 = vpop.f32.mrf.mxu0
      %v446 = vadd.f32 0.0, %v445
      %v447 = vpop.f32.mrf.mxu0
      %448 = vmatprep.mubr.bf16.mxu0 0
      %449 = vmatmul.mubr.bf16.gmra.mxu0 %v301
      %v450 = vpop.f32.mrf.mxu0
      %v451 = vadd.f32 0.0, %v450
      %v452 = vpop.f32.mrf.mxu0
      %v453 = vpop.f32.mrf.mxu0
      %v454 = vadd.f32 0.0, %v453
      %v455 = vpop.f32.mrf.mxu0
      %456 = vmatprep.mubr.bf16.mxu0 0
      %457 = vmatmul.mubr.bf16.gmra.mxu0 %v302
      %v458 = vpop.f32.mrf.mxu0
      %v459 = vadd.f32 0.0, %v458
      %v460 = vpop.f32.mrf.mxu0
      %v461 = vpop.f32.mrf.mxu0
      %v462 = vadd.f32 0.0, %v461
      %v463 = vpop.f32.mrf.mxu0
      %464 = vmatprep.mubr.bf16.mxu0 0
      %465 = vmatmul.mubr.bf16.gmra.mxu0 %v303
      %v466 = vpop.f32.mrf.mxu0
      %v467 = vadd.f32 0.0, %v466
      %v468 = vpop.f32.mrf.mxu0
      %v469 = vpop.f32.mrf.mxu0
      %v470 = vadd.f32 0.0, %v469
      %v471 = vpop.f32.mrf.mxu0
      %472 = vmatprep.mubr.bf16.mxu0 0
      %473 = vmatmul.mubr.bf16.gmra.mxu0 %v304
      %v474 = vpop.f32.mrf.mxu0
      %v475 = vadd.f32 0.0, %v474
      %v476 = vpop.f32.mrf.mxu0
      %v477 = vpop.f32.mrf.mxu0
      %v478 = vadd.f32 0.0, %v477
      %v479 = vpop.f32.mrf.mxu0
      %480 = vmatprep.mubr.bf16.mxu0 0
      %481 = vmatmul.mubr.bf16.gmra.mxu0 %v305
      %v482 = vpop.f32.mrf.mxu0
      %v483 = vadd.f32 0.0, %v482
      %v484 = vpop.f32.mrf.mxu0
      %v485 = vpop.f32.mrf.mxu0
      %v486 = vadd.f32 0.0, %v485
      %v487 = vpop.f32.mrf.mxu0
      %488 = vmatprep.mubr.bf16.mxu0 0
      %489 = vmatmul.mubr.bf16.gmra.mxu0 %v306
      %v490 = vpop.f32.mrf.mxu0
      %v491 = vadd.f32 0.0, %v490
      %v492 = vpop.f32.mrf.mxu0
      %v493 = vpop.f32.mrf.mxu0
      %v494 = vadd.f32 0.0, %v493
      %v495 = vpop.f32.mrf.mxu0
      %496 = vmatprep.mubr.bf16.mxu0 0
      %497 = vmatmul.mubr.bf16.gmra.mxu0 %v307
      %v498 = vpop.f32.mrf.mxu0
      %v499 = vadd.f32 0.0, %v498
      %v500 = vpop.f32.mrf.mxu0
      %v501 = vpop.f32.mrf.mxu0
      %v502 = vadd.f32 0.0, %v501
      %v503 = vpop.f32.mrf.mxu0
      %504 = vmatprep.mubr.bf16.mxu0 0
      %505 = vmatmul.mubr.bf16.gmra.mxu0 %v308
      %v506 = vpop.f32.mrf.mxu0
      %v507 = vadd.f32 0.0, %v506
      %v508 = vpop.f32.mrf.mxu0
      %v509 = vpop.f32.mrf.mxu0
      %v510 = vadd.f32 0.0, %v509
      %v511 = vpop.f32.mrf.mxu0
      %512 = vmatprep.mubr.bf16.mxu0 0
      %513 = vmatmul.mubr.bf16.gmra.mxu0 %v309
      %v514 = vpop.f32.mrf.mxu0
      %v515 = vadd.f32 0.0, %v514
      %v516 = vpop.f32.mrf.mxu0
      %v517 = vpop.f32.mrf.mxu0
      %v518 = vadd.f32 0.0, %v517
      %v519 = vpop.f32.mrf.mxu0
      %520 = vmatprep.mubr.bf16.mxu0 0
      %521 = vmatmul.mubr.bf16.gmra.mxu0 %v310
      %v522 = vpop.f32.mrf.mxu0
      %v523 = vadd.f32 0.0, %v522
      %v524 = vpop.f32.mrf.mxu0
      %v525 = vpop.f32.mrf.mxu0
      %v526 = vadd.f32 0.0, %v525
      %v527 = vpop.f32.mrf.mxu0
      %528 = vmatprep.mubr.bf16.mxu0 0
      %529 = vmatmul.mubr.bf16.gmra.mxu0 %v311
      %v530 = vpop.f32.mrf.mxu0
      %v531 = vadd.f32 0.0, %v530
      %v532 = vpop.f32.mrf.mxu0
      %v533 = vpop.f32.mrf.mxu0
      %v534 = vadd.f32 0.0, %v533
      %v535 = vpop.f32.mrf.mxu0
      %536 = vdwg.mxu0
      %v537 = vpack.c.bf16 %v414, %v411
      %v538 = vpack.c.bf16 %v422, %v419
      %v539 = vpack.c.bf16 %v430, %v427
      %v540 = vpack.c.bf16 %v438, %v435
      %v541 = vpack.c.bf16 %v446, %v443
      %v542 = vpack.c.bf16 %v454, %v451
      %v543 = vpack.c.bf16 %v462, %v459
      %v544 = vpack.c.bf16 %v470, %v467
      %v545 = vpack.c.bf16 %v478, %v475
      %v546 = vpack.c.bf16 %v486, %v483
      %v547 = vpack.c.bf16 %v494, %v491
      %v548 = vpack.c.bf16 %v502, %v499
      %v549 = vpack.c.bf16 %v510, %v507
      %v550 = vpack.c.bf16 %v518, %v515
      %v551 = vpack.c.bf16 %v526, %v523
      %v552 = vpack.c.bf16 %v534, %v531
      %v569 = vunpack.c.l.b16 %v537
      %v570 = vunpack.c.h.b16 %v537
      %v571 = vunpack.c.l.b16 %v538
      %v572 = vunpack.c.h.b16 %v538
      %v573 = vunpack.c.l.b16 %v539
      %v574 = vunpack.c.h.b16 %v539
      %v575 = vunpack.c.l.b16 %v540
      %v576 = vunpack.c.h.b16 %v540
      %v577 = vunpack.c.l.b16 %v541
      %v578 = vunpack.c.h.b16 %v541
      %v579 = vunpack.c.l.b16 %v542
      %v580 = vunpack.c.h.b16 %v542
      %v581 = vunpack.c.l.b16 %v543
      %v582 = vunpack.c.h.b16 %v543
      %v583 = vunpack.c.l.b16 %v544
      %v584 = vunpack.c.h.b16 %v544
      %v585 = vunpack.c.l.b16 %v545
      %v586 = vunpack.c.h.b16 %v545
      %v587 = vunpack.c.l.b16 %v546
      %v588 = vunpack.c.h.b16 %v546
      %v589 = vunpack.c.l.b16 %v547
      %v590 = vunpack.c.h.b16 %v547
      %v591 = vunpack.c.l.b16 %v548
      %v592 = vunpack.c.h.b16 %v548
      %v593 = vunpack.c.l.b16 %v549
      %v594 = vunpack.c.h.b16 %v549
      %v595 = vunpack.c.l.b16 %v550
      %v596 = vunpack.c.h.b16 %v550
      %v597 = vunpack.c.l.b16 %v551
      %v598 = vunpack.c.h.b16 %v551
      %v599 = vunpack.c.l.b16 %v552
      %v600 = vunpack.c.h.b16 %v552
      %v601 = vpack.c.b16 %v569, %v569
      %v602 = vpack.c.b16 %v570, %v570
      %v603 = vpack.c.b16 %v571, %v571
      %v604 = vpack.c.b16 %v572, %v572
      %v605 = vpack.c.b16 %v573, %v573
      %v606 = vpack.c.b16 %v574, %v574
      %v607 = vpack.c.b16 %v575, %v575
      %v608 = vpack.c.b16 %v576, %v576
      %v609 = vpack.c.b16 %v577, %v577
      %v610 = vpack.c.b16 %v578, %v578
      %v611 = vpack.c.b16 %v579, %v579
      %v612 = vpack.c.b16 %v580, %v580
      %v613 = vpack.c.b16 %v581, %v581
      %v614 = vpack.c.b16 %v582, %v582
      %v615 = vpack.c.b16 %v583, %v583
      %v616 = vpack.c.b16 %v584, %v584
      %v617 = vpack.c.b16 %v585, %v585
      %v618 = vpack.c.b16 %v586, %v586
      %v619 = vpack.c.b16 %v587, %v587
      %v620 = vpack.c.b16 %v588, %v588
      %v621 = vpack.c.b16 %v589, %v589
      %v622 = vpack.c.b16 %v590, %v590
      %v623 = vpack.c.b16 %v591, %v591
      %v624 = vpack.c.b16 %v592, %v592
      %v625 = vpack.c.b16 %v593, %v593
      %v626 = vpack.c.b16 %v594, %v594
      %v627 = vpack.c.b16 %v595, %v595
      %v628 = vpack.c.b16 %v596, %v596
      %v629 = vpack.c.b16 %v597, %v597
      %v630 = vpack.c.b16 %v598, %v598
      %v631 = vpack.c.b16 %v599, %v599
      %v632 = vpack.c.b16 %v600, %v600
      %665 = vst [vmem:[%s181] sm:$0xf] %v601
      %666 = vst [vmem:[%s181 + $0x4] sm:$0xf] %v602
      %667 = vst [vmem:[%s181 + $0x8] sm:$0xf] %v603
      %668 = vst [vmem:[%s181 + $0xc] sm:$0xf] %v604
      %669 = vst [vmem:[%s181 + $0x10] sm:$0xf] %v605
      %670 = vst [vmem:[%s181 + $0x14] sm:$0xf] %v606
      %671 = vst [vmem:[%s181 + $0x18] sm:$0xf] %v607
      %672 = vst [vmem:[%s181 + $0x1c] sm:$0xf] %v608
      %673 = vst [vmem:[%s181 + $0x20] sm:$0xf] %v609
      %674 = vst [vmem:[%s181 + $0x24] sm:$0xf] %v610
      %675 = vst [vmem:[%s181 + $0x28] sm:$0xf] %v611
      %676 = vst [vmem:[%s181 + $0x2c] sm:$0xf] %v612
      %677 = vst [vmem:[%s181 + $0x30] sm:$0xf] %v613
      %678 = vst [vmem:[%s181 + $0x34] sm:$0xf] %v614
      %679 = vst [vmem:[%s181 + $0x38] sm:$0xf] %v615
      %680 = vst [vmem:[%s181 + $0x3c] sm:$0xf] %v616
      %681 = vst [vmem:[%s181 + $0x40] sm:$0xf] %v617
      %682 = vst [vmem:[%s181 + $0x44] sm:$0xf] %v618
      %683 = vst [vmem:[%s181 + $0x48] sm:$0xf] %v619
      %684 = vst [vmem:[%s181 + $0x4c] sm:$0xf] %v620
      %685 = vst [vmem:[%s181 + $0x50] sm:$0xf] %v621
      %686 = vst [vmem:[%s181 + $0x54] sm:$0xf] %v622
      %687 = vst [vmem:[%s181 + $0x58] sm:$0xf] %v623
      %688 = vst [vmem:[%s181 + $0x5c] sm:$0xf] %v624
      %689 = vst [vmem:[%s181 + $0x60] sm:$0xf] %v625
      %690 = vst [vmem:[%s181 + $0x64] sm:$0xf] %v626
      %691 = vst [vmem:[%s181 + $0x68] sm:$0xf] %v627
      %692 = vst [vmem:[%s181 + $0x6c] sm:$0xf] %v628
      %693 = vst [vmem:[%s181 + $0x70] sm:$0xf] %v629
      %694 = vst [vmem:[%s181 + $0x74] sm:$0xf] %v630
      %695 = vst [vmem:[%s181 + $0x78] sm:$0xf] %v631
      %696 = vst [vmem:[%s181 + $0x7c] sm:$0xf] %v632
      %s697 = smul.u32 32, %s18
      %p698 = scmp.lt.s32.totalorder %s17, 1
      %s699 = scalar_select %p698, %s17, 1
      %p700 = scmp.lt.s32.totalorder %s697, 63
      %s701 = scalar_select %p700, %s697, 63
      %s702 = smul.addr %s699, 64
      %s703 = sadd.s32 %s701, %s702
      %s704 = smul.addr %s703, 4
      %s705 = scalar_lea.vmem %s2, %s704
      // Predicated region
      $region29: #{grace_forward.4} parent=27 // pred_check
        %p706 = pneg %p94
      $region30: #{grace_forward.4} parent=27 // pred_check_branch
        %708 = sbr.rel (%p706) target = $region32
      $region31: #{grace_forward.4} parent=27 // pred_region
        %s709 = smul.u32 32, %s18
      $region32: #{grace_forward.4} parent=27 // pred_fallthru
        _
    $region28: #{grace_forward.4} parent=5 // pred_fallthru
      _
    %p710 = scmp.le.s32.totalorder 2, %s8
    // Predicated region
    $region33: #{grace_forward.4} parent=5 // pred_check
      %p711 = pneg %p710
    $region34: #{grace_forward.4} parent=5 // pred_check_branch
      %713 = sbr.rel (%p711) target = $region36
    $region35: #{grace_forward.4} parent=5 // pred_region
      %s714 = ssub.s32 %s8, 2
      // Predicated region
      $region37: #{grace_forward.4} parent=35 // pred_check
        %p715 = pneg %p100
      $region38: #{grace_forward.4} parent=35 // pred_check_branch
        %717 = sbr.rel (%p715) target = $region40
      $region39: #{grace_forward.4} parent=35 // pred_region
        %s718 = smul.u32 32, %s20
        %p719 = scmp.lt.s32.totalorder %s19, 1
        %s720 = scalar_select %p719, %s19, 1
        %p721 = scmp.lt.s32.totalorder %s718, 63
        %s722 = scalar_select %p721, %s718, 63
        %s723 = smul.addr %s720, 64
        %s724 = sadd.s32 %s722, %s723
        %s725 = smul.addr %s724, 4
        %s726 = scalar_lea.vmem %s2, %s725
      $region40: #{grace_forward.4} parent=35 // pred_fallthru
        _
    $region36: #{grace_forward.4} parent=5 // pred_fallthru
      _
  $region6: #{grace_forward.4} parent=0 // loop_footer
    %s12 = sadd.s32 1, %s8
  $region7: #{grace_forward.4} parent=0 // loop_footer_branch
    %7 = sbr.rel target = $region3
  $region8: #{grace_forward.4} parent=0 // loop_exit
    _

// kernel: grace_forward.5
$region0: #{grace_forward.5}
  #allocation0 [shape = 'u32[]', space=smem, size = 0x4, offset = 0x4, fixed_abs, tag = 'smem constant byte address 0x4 - core index']
  #allocation1 [shape = 'u32[144,128]{1,0:T(1,128)}', space=vmem, size = 0x12000, scoped, tag = 'internal scratch']
  #allocation2 [shape = 'f32[256,128]{1,0:T(8,128)}', space=vmem, size = 0x20000, scoped, tag = 'scratch operand']
  #allocation3 [shape = 'f32[1]{0:T(128)S(6)}', space=smem, size = 0x200, scoped, tag = 'scoped memory for grace_forward.5']
  %s0 = inlined_call_operand.<no memory space> [shape: f32[1], index: 0, kind: input, shape index: {}]
  %s1 = inlined_call_operand.vmem [shape: bf16[2,512,512], index: 1, kind: input, shape index: {}]
  %s2 = inlined_call_operand.vmem [shape: bf16[2,512,128], index: 2, kind: input, shape index: {}]
  %s3 = inlined_call_operand.vmem [shape: f32[1,128], index: 3, kind: input, shape index: {}]
  %s4 = inlined_call_operand.vmem [shape: bf16[128,128], index: 4, kind: input, shape index: {}]
  %s5 = inlined_call_operand.vmem [shape: f32[1,128], index: 5, kind: input, shape index: {}]
  %s6 = inlined_call_operand.vmem [shape: bf16[128,128], index: 6, kind: input, shape index: {}]
  %s7 = inlined_call_operand.vmem [shape: f32[1,128], index: 7, kind: input, shape index: {}]
  %s8 = inlined_call_operand.vmem [shape: f32[2,512,128], index: 8, kind: output, shape index: {}]
  %s9 = sld [smem:[#allocation0]]
  $region111: #{grace_forward.5} parent=0
    _
  %s11 = ssub.s32 1, %s9
  %s12 = scalar_select 0, %s11, %s9
  %13 = sst [smem:[#allocation3]] %s0
  $region1: #{grace_forward.5} parent=0
    #allocation4 [shape = 'u8[262144]{0}', space=vmem, size = 0x40000, scoped, tag = 'input window, operand 1']
    loop: start=0, step=1, limit=10
    $region2: #{grace_forward.5} parent=1 // loop_pre_header
      _
    $region3: #{grace_forward.5} parent=1 // loop_header
      %s15 = sphi 0, %s19
      %p16 = scmp.ge.s32.totalorder %s15, 10
      %s22 = sphi 0, %s41
      %s23 = sphi 0, %s37
      %s24 = sphi 0, %s33
      %s25 = sphi 0, %s22
      %s26 = sphi 0, %s23
      %s27 = sphi 0, %s24
      %s28 = sphi 0, %s25
      %s29 = sphi 0, %s26
      %s30 = sphi 0, %s27
      %s42 = sphi 0, %s42
      %s44 = sphi 0, %s42
      %s45 = sphi 0, %s44
      %s59 = sphi 0, %s45
      %s69 = sphi 0, %s71
      %s72 = sphi 0, %s69
      %s73 = sphi 0, %s72
      %s89 = sphi 0, %s73
      %s97 = sphi 0, %s99
      %s100 = sphi 0, %s97
      %s101 = sphi 0, %s100
      %s117 = sphi 0, %s101
      %s121 = sphi 0, %s121
      %s123 = sphi 0, %s121
      %s124 = sphi 0, %s123
      %s138 = sphi 0, %s124
      %s142 = sphi 0, %s142
      %s144 = sphi 0, %s142
      %s145 = sphi 0, %s144
      %s159 = sphi 0, %s145
      %s163 = sphi 0, %s163
      %s165 = sphi 0, %s163
      %s166 = sphi 0, %s165
      %s180 = sphi 0, %s166
      %s184 = sphi 0, %s184
      %s186 = sphi 0, %s184
      %s187 = sphi 0, %s186
      %s201 = sphi 0, %s187
      %s205 = sphi 0, %s205
      %s207 = sphi 0, %s205
      %s208 = sphi 0, %s207
      %s222 = sphi 0, %s208
      %s230 = sphi 0, %s232
      %s233 = sphi 0, %s230
      %s234 = sphi 0, %s233
      %s250 = sphi 0, %s234
    $region4: #{grace_forward.5} parent=1 // loop_header_branch
      %18 = sbr.rel (%p16) target = $region8
    $region5: #{grace_forward.5} parent=1 // loop_body
      %s20 = ssub.s32 %s15, 1
      %s21 = ssub.s32 %s15, 2
      %s31 = sadd.s32 1, %s24
      %p32 = scmp.ge.s32.totalorder %s31, 2
      %s33 = scalar_select %p32, 0, %s31
      %s34 = sadd.s32 1, %s23
      %s35 = scalar_select %p32, %s34, %s23
      %p36 = scmp.ge.s32.totalorder %s35, 2
      %s37 = scalar_select %p36, 0, %s35
      %s38 = sadd.s32 1, %s22
      %s39 = scalar_select %p36, %s38, %s22
      %p40 = scmp.ge.s32.totalorder %s39, 2
      %s41 = scalar_select %p40, 0, %s39
      %s43 = sadd.s32 %s42, 1
      %p46 = scmp.eq.s32.totalorder %s15, 7
      %p47 = scmp.ne.s32.totalorder %s42, %s44
      %p48 = scmp.eq.s32.totalorder %s15, 0
      %p49 = por %p47, %p48
      %p50 = scmp.ne.s32.totalorder %s42, %s44
      %p51 = scmp.eq.s32.totalorder %s20, 7
      %p52 = por %p50, %p51
      %p53 = scmp.ne.s32.totalorder %s44, %s45
      %p54 = scmp.eq.s32.totalorder %s20, 0
      %p55 = por %p53, %p54
      %p56 = scmp.ne.s32.totalorder %s44, %s45
      %p57 = scmp.eq.s32.totalorder %s21, 7
      %p58 = por %p56, %p57
      %p60 = scmp.ne.s32.totalorder %s45, %s59
      %p61 = scmp.eq.s32.totalorder %s21, 0
      %p62 = por %p60, %p61
      %s63 = ssub.s32 %s22, %s41
      %s64 = ssub.s32 %s23, %s37
      %s65 = sor.u32 %s63, %s64
      %s66 = ssub.s32 %s24, %s33
      %s67 = sor.u32 %s65, %s66
      %p68 = scmp.eq.s32.totalorder %s67, 0
      %s70 = sadd.s32 %s69, 1
      %s71 = scalar_select %p68, %s69, %s70
      %p74 = pneg %p68
      %p75 = scmp.eq.s32.totalorder %s15, 7
      %p76 = por %p74, %p75
      %p77 = scmp.ne.s32.totalorder %s69, %s72
      %p78 = scmp.eq.s32.totalorder %s15, 0
      %p79 = por %p77, %p78
      %p80 = scmp.ne.s32.totalorder %s69, %s72
      %p81 = scmp.eq.s32.totalorder %s20, 7
      %p82 = por %p80, %p81
      %p83 = scmp.ne.s32.totalorder %s72, %s73
      %p84 = scmp.eq.s32.totalorder %s20, 0
      %p85 = por %p83, %p84
      %p86 = scmp.ne.s32.totalorder %s72, %s73
      %p87 = scmp.eq.s32.totalorder %s21, 7
      %p88 = por %p86, %p87
      %p90 = scmp.ne.s32.totalorder %s73, %s89
      %p91 = scmp.eq.s32.totalorder %s21, 0
      %p92 = por %p90, %p91
      %s93 = ssub.s32 %s22, %s41
      %s94 = ssub.s32 %s24, %s33
      %s95 = sor.u32 %s93, %s94
      %p96 = scmp.eq.s32.totalorder %s95, 0
      %s98 = sadd.s32 %s97, 1
      %s99 = scalar_select %p96, %s97, %s98
      %p102 = pneg %p96
      %p103 = scmp.eq.s32.totalorder %s15, 7
      %p104 = por %p102, %p103
      %p105 = scmp.ne.s32.totalorder %s97, %s100
      %p106 = scmp.eq.s32.totalorder %s15, 0
      %p107 = por %p105, %p106
      %p108 = scmp.ne.s32.totalorder %s97, %s100
      %p109 = scmp.eq.s32.totalorder %s20, 7
      %p110 = por %p108, %p109
      %p111 = scmp.ne.s32.totalorder %s100, %s101
      %p112 = scmp.eq.s32.totalorder %s20, 0
      %p113 = por %p111, %p112
      %p114 = scmp.ne.s32.totalorder %s100, %s101
      %p115 = scmp.eq.s32.totalorder %s21, 7
      %p116 = por %p114, %p115
      %p118 = scmp.ne.s32.totalorder %s101, %s117
      %p119 = scmp.eq.s32.totalorder %s21, 0
      %p120 = por %p118, %p119
      %s122 = sadd.s32 %s121, 1
      %p125 = scmp.eq.s32.totalorder %s15, 7
      %p126 = scmp.ne.s32.totalorder %s121, %s123
      %p127 = scmp.eq.s32.totalorder %s15, 0
      %p128 = por %p126, %p127
      %p129 = scmp.ne.s32.totalorder %s121, %s123
      %p130 = scmp.eq.s32.totalorder %s20, 7
      %p131 = por %p129, %p130
      %p132 = scmp.ne.s32.totalorder %s123, %s124
      %p133 = scmp.eq.s32.totalorder %s20, 0
      %p134 = por %p132, %p133
      %p135 = scmp.ne.s32.totalorder %s123, %s124
      %p136 = scmp.eq.s32.totalorder %s21, 7
      %p137 = por %p135, %p136
      %p139 = scmp.ne.s32.totalorder %s124, %s138
      %p140 = scmp.eq.s32.totalorder %s21, 0
      %p141 = por %p139, %p140
      %s143 = sadd.s32 %s142, 1
      %p146 = scmp.eq.s32.totalorder %s15, 7
      %p147 = scmp.ne.s32.totalorder %s142, %s144
      %p148 = scmp.eq.s32.totalorder %s15, 0
      %p149 = por %p147, %p148
      %p150 = scmp.ne.s32.totalorder %s142, %s144
      %p151 = scmp.eq.s32.totalorder %s20, 7
      %p152 = por %p150, %p151
      %p153 = scmp.ne.s32.totalorder %s144, %s145
      %p154 = scmp.eq.s32.totalorder %s20, 0
      %p155 = por %p153, %p154
      %p156 = scmp.ne.s32.totalorder %s144, %s145
      %p157 = scmp.eq.s32.totalorder %s21, 7
      %p158 = por %p156, %p157
      %p160 = scmp.ne.s32.totalorder %s145, %s159
      %p161 = scmp.eq.s32.totalorder %s21, 0
      %p162 = por %p160, %p161
      %s164 = sadd.s32 %s163, 1
      %p167 = scmp.eq.s32.totalorder %s15, 7
      %p168 = scmp.ne.s32.totalorder %s163, %s165
      %p169 = scmp.eq.s32.totalorder %s15, 0
      %p170 = por %p168, %p169
      %p171 = scmp.ne.s32.totalorder %s163, %s165
      %p172 = scmp.eq.s32.totalorder %s20, 7
      %p173 = por %p171, %p172
      %p174 = scmp.ne.s32.totalorder %s165, %s166
      %p175 = scmp.eq.s32.totalorder %s20, 0
      %p176 = por %p174, %p175
      %p177 = scmp.ne.s32.totalorder %s165, %s166
      %p178 = scmp.eq.s32.totalorder %s21, 7
      %p179 = por %p177, %p178
      %p181 = scmp.ne.s32.totalorder %s166, %s180
      %p182 = scmp.eq.s32.totalorder %s21, 0
      %p183 = por %p181, %p182
      %s185 = sadd.s32 %s184, 1
      %p188 = scmp.eq.s32.totalorder %s15, 7
      %p189 = scmp.ne.s32.totalorder %s184, %s186
      %p190 = scmp.eq.s32.totalorder %s15, 0
      %p191 = por %p189, %p190
      %p192 = scmp.ne.s32.totalorder %s184, %s186
      %p193 = scmp.eq.s32.totalorder %s20, 7
      %p194 = por %p192, %p193
      %p195 = scmp.ne.s32.totalorder %s186, %s187
      %p196 = scmp.eq.s32.totalorder %s20, 0
      %p197 = por %p195, %p196
      %p198 = scmp.ne.s32.totalorder %s186, %s187
      %p199 = scmp.eq.s32.totalorder %s21, 7
      %p200 = por %p198, %p199
      %p202 = scmp.ne.s32.totalorder %s187, %s201
      %p203 = scmp.eq.s32.totalorder %s21, 0
      %p204 = por %p202, %p203
      %s206 = sadd.s32 %s205, 1
      %p209 = scmp.eq.s32.totalorder %s15, 7
      %p210 = scmp.ne.s32.totalorder %s205, %s207
      %p211 = scmp.eq.s32.totalorder %s15, 0
      %p212 = por %p210, %p211
      %p213 = scmp.ne.s32.totalorder %s205, %s207
      %p214 = scmp.eq.s32.totalorder %s20, 7
      %p215 = por %p213, %p214
      %p216 = scmp.ne.s32.totalorder %s207, %s208
      %p217 = scmp.eq.s32.totalorder %s20, 0
      %p218 = por %p216, %p217
      %p219 = scmp.ne.s32.totalorder %s207, %s208
      %p220 = scmp.eq.s32.totalorder %s21, 7
      %p221 = por %p219, %p220
      %p223 = scmp.ne.s32.totalorder %s208, %s222
      %p224 = scmp.eq.s32.totalorder %s21, 0
      %p225 = por %p223, %p224
      %s226 = ssub.s32 %s22, %s41
      %s227 = ssub.s32 %s23, %s37
      %s228 = sor.u32 %s226, %s227
      %p229 = scmp.eq.s32.totalorder %s228, 0
      %s231 = sadd.s32 %s230, 1
      %s232 = scalar_select %p229, %s230, %s231
      %p235 = pneg %p229
      %p236 = scmp.eq.s32.totalorder %s15, 7
      %p237 = por %p235, %p236
      %p238 = scmp.ne.s32.totalorder %s230, %s233
      %p239 = scmp.eq.s32.totalorder %s15, 0
      %p240 = por %p238, %p239
      %p241 = scmp.ne.s32.totalorder %s230, %s233
      %p242 = scmp.eq.s32.totalorder %s20, 7
      %p243 = por %p241, %p242
      %p244 = scmp.ne.s32.totalorder %s233, %s234
      %p245 = scmp.eq.s32.totalorder %s20, 0
      %p246 = por %p244, %p245
      %p247 = scmp.ne.s32.totalorder %s233, %s234
      %p248 = scmp.eq.s32.totalorder %s21, 7
      %p249 = por %p247, %p248
      %p251 = scmp.ne.s32.totalorder %s234, %s250
      %p252 = scmp.eq.s32.totalorder %s21, 0
      %p253 = por %p251, %p252
      %p254 = scmp.le.s32.totalorder 1, %s15
      %p255 = scmp.lt.s32.totalorder %s15, 9
      %p256 = pnand %p254, %p255
      %p257 = pneg %p256
      // Predicated region
      $region9: #{grace_forward.5} parent=5 // pred_check
        _
      $region10: #{grace_forward.5} parent=5 // pred_check_branch
        %259 = sbr.rel (%p256) target = $region12
      $region11: #{grace_forward.5} parent=5 // pred_region
        %s260 = ssub.s32 %s15, 1
        // Predicated region
        $region13: #{grace_forward.5} parent=11 // pred_check
          %p261 = pneg %p55
        $region14: #{grace_forward.5} parent=11 // pred_check_branch
          %263 = sbr.rel (%p261) target = $region16
        $region15: #{grace_forward.5} parent=11 // pred_region
          _
        $region16: #{grace_forward.5} parent=11 // pred_fallthru
          _
        // Predicated region
        $region17: #{grace_forward.5} parent=11 // pred_check
          %p264 = pneg %p134
        $region18: #{grace_forward.5} parent=11 // pred_check_branch
          %266 = sbr.rel (%p264) target = $region20
        $region19: #{grace_forward.5} parent=11 // pred_region
          _
        $region20: #{grace_forward.5} parent=11 // pred_fallthru
          _
        // Predicated region
        $region21: #{grace_forward.5} parent=11 // pred_check
          %p267 = pneg %p155
        $region22: #{grace_forward.5} parent=11 // pred_check_branch
          %269 = sbr.rel (%p267) target = $region24
        $region23: #{grace_forward.5} parent=11 // pred_region
          _
        $region24: #{grace_forward.5} parent=11 // pred_fallthru
          _
        // Predicated region
        $region25: #{grace_forward.5} parent=11 // pred_check
          %p270 = pneg %p176
        $region26: #{grace_forward.5} parent=11 // pred_check_branch
          %272 = sbr.rel (%p270) target = $region28
        $region27: #{grace_forward.5} parent=11 // pred_region
          _
        $region28: #{grace_forward.5} parent=11 // pred_fallthru
          _
        // Predicated region
        $region29: #{grace_forward.5} parent=11 // pred_check
          %p273 = pneg %p197
        $region30: #{grace_forward.5} parent=11 // pred_check_branch
          %275 = sbr.rel (%p273) target = $region32
        $region31: #{grace_forward.5} parent=11 // pred_region
          _
        $region32: #{grace_forward.5} parent=11 // pred_fallthru
          _
        // Predicated region
        $region33: #{grace_forward.5} parent=11 // pred_check
          %p276 = pneg %p218
        $region34: #{grace_forward.5} parent=11 // pred_check_branch
          %278 = sbr.rel (%p276) target = $region36
        $region35: #{grace_forward.5} parent=11 // pred_region
          _
        $region36: #{grace_forward.5} parent=11 // pred_fallthru
          _
      $region12: #{grace_forward.5} parent=5 // pred_fallthru
        _
      %p279 = scmp.lt.s32.totalorder %s15, 8
      // Predicated region
      $region37: #{grace_forward.5} parent=5 // pred_check
        %p280 = pneg %p279
      $region38: #{grace_forward.5} parent=5 // pred_check_branch
        %282 = sbr.rel (%p280) target = $region40
      $region39: #{grace_forward.5} parent=5 // pred_region
        // Predicated region
        $region41: #{grace_forward.5} parent=39 // pred_check
          %p283 = pneg %p79
        $region42: #{grace_forward.5} parent=39 // pred_check_branch
          %285 = sbr.rel (%p283) target = $region44
        $region43: #{grace_forward.5} parent=39 // pred_region
          %s286 = sand.u32 %s69, 1
          %s287 = sand.u32 %s69, 1
          %s288 = smul.addr %s287, 256
          %s289 = scalar_lea.vmem [#allocation4], %s288
          %s290 = smul.u32 32, %s23
          %s291 = smul.u32 2, %s24
          %s292 = smul.addr %s290, 4
          %s293 = sadd.s32 %s291, %s292
          %s294 = smul.addr %s22, 256
          %s295 = sadd.s32 %s293, %s294
          %s296 = smul.addr %s295, 4
          %s297 = scalar_lea.vmem %s1, %s296
          // Predicated region
          $region45: #{grace_forward.5} parent=43 // pred_check
            _
          $region46: #{grace_forward.5} parent=43 // pred_check_branch
            %299 = sbr.rel (0) target = $region48
          $region47: #{grace_forward.5} parent=43 // pred_region
            // Predicated region
            $region49: #{grace_forward.5} parent=47 // pred_check
              _
            $region50: #{grace_forward.5} parent=47 // pred_check_branch
              %301 = sbr.rel (0) target = $region52
            $region51: #{grace_forward.5} parent=47 // pred_region
              // Predicated region
              $region64: #{grace_forward.5} parent=51 // pred_check
                _
              $region65: #{grace_forward.5} parent=51 // pred_check_branch
                %379 = sbr.rel (0) target = $region67
              $region66: #{grace_forward.5} parent=51 // pred_region
                loop: start=0, step=1, limit=1
                $region68: #{grace_forward.5} parent=66 // loop_pre_header
                  _
                $region69: #{grace_forward.5} parent=66 // loop_header
                  %s381 = sphi 0, %s385
                  %p382 = scmp.ge.s32.totalorder %s381, 1
                  %s386 = sphi %s297, %s297
                  %s387 = sphi %s289, %s289
                $region70: #{grace_forward.5} parent=66 // loop_header_branch
                  %384 = sbr.rel (%p382) target = $region74
                $region71: #{grace_forward.5} parent=66 // loop_body
                  %v388 = vld [vmem:[%s386] sm:$0xff]
                  %389 = vst [vmem:[%s387] sm:$0xff] %v388
                  %v390 = vld [vmem:[%s386 + $0x10] sm:$0xff]
                  %391 = vst [vmem:[%s387 + $0x8] sm:$0xff] %v390
                  %v392 = vld [vmem:[%s386 + $0x20] sm:$0xff]
                  %393 = vst [vmem:[%s387 + $0x10] sm:$0xff] %v392
                  %v394 = vld [vmem:[%s386 + $0x30] sm:$0xff]
                  %395 = vst [vmem:[%s387 + $0x18] sm:$0xff] %v394
                  %v396 = vld [vmem:[%s386 + $0x40] sm:$0xff]
                  %397 = vst [vmem:[%s387 + $0x20] sm:$0xff] %v396
                  %v398 = vld [vmem:[%s386 + $0x50] sm:$0xff]
                  %399 = vst [vmem:[%s387 + $0x28] sm:$0xff] %v398
                  %v400 = vld [vmem:[%s386 + $0x60] sm:$0xff]
                  %401 = vst [vmem:[%s387 + $0x30] sm:$0xff] %v400
                  %v402 = vld [vmem:[%s386 + $0x70] sm:$0xff]
                  %403 = vst [vmem:[%s387 + $0x38] sm:$0xff] %v402
                  %v404 = vld [vmem:[%s386 + $0x80] sm:$0xff]
                  %405 = vst [vmem:[%s387 + $0x40] sm:$0xff] %v404
                  %v406 = vld [vmem:[%s386 + $0x90] sm:$0xff]
                  %407 = vst [vmem:[%s387 + $0x48] sm:$0xff] %v406
                  %v408 = vld [vmem:[%s386 + $0xa0] sm:$0xff]
                  %409 = vst [vmem:[%s387 + $0x50] sm:$0xff] %v408
                  %v410 = vld [vmem:[%s386 + $0xb0] sm:$0xff]
                  %411 = vst [vmem:[%s387 + $0x58] sm:$0xff] %v410
                  %v412 = vld [vmem:[%s386 + $0xc0] sm:$0xff]
                  %413 = vst [vmem:[%s387 + $0x60] sm:$0xff] %v412
                  %v414 = vld [vmem:[%s386 + $0xd0] sm:$0xff]
                  %415 = vst [vmem:[%s387 + $0x68] sm:$0xff] %v414
                  %v416 = vld [vmem:[%s386 + $0xe0] sm:$0xff]
                  %417 = vst [vmem:[%s387 + $0x70] sm:$0xff] %v416
                  %v418 = vld [vmem:[%s386 + $0xf0] sm:$0xff]
                  %419 = vst [vmem:[%s387 + $0x78] sm:$0xff] %v418
                  %v420 = vld [vmem:[%s386 + $0x100] sm:$0xff]
                  %421 = vst [vmem:[%s387 + $0x80] sm:$0xff] %v420
                  %v422 = vld [vmem:[%s386 + $0x110] sm:$0xff]
                  %423 = vst [vmem:[%s387 + $0x88] sm:$0xff] %v422
                  %v424 = vld [vmem:[%s386 + $0x120] sm:$0xff]
                  %425 = vst [vmem:[%s387 + $0x90] sm:$0xff] %v424
                  %v426 = vld [vmem:[%s386 + $0x130] sm:$0xff]
                  %427 = vst [vmem:[%s387 + $0x98] sm:$0xff] %v426
                  %v428 = vld [vmem:[%s386 + $0x140] sm:$0xff]
                  %429 = vst [vmem:[%s387 + $0xa0] sm:$0xff] %v428
                  %v430 = vld [vmem:[%s386 + $0x150] sm:$0xff]
                  %431 = vst [vmem:[%s387 + $0xa8] sm:$0xff] %v430
                  %v432 = vld [vmem:[%s386 + $0x160] sm:$0xff]
                  %433 = vst [vmem:[%s387 + $0xb0] sm:$0xff] %v432
                  %v434 = vld [vmem:[%s386 + $0x170] sm:$0xff]
                  %435 = vst [vmem:[%s387 + $0xb8] sm:$0xff] %v434
                  %v436 = vld [vmem:[%s386 + $0x180] sm:$0xff]
                  %437 = vst [vmem:[%s387 + $0xc0] sm:$0xff] %v436
                  %v438 = vld [vmem:[%s386 + $0x190] sm:$0xff]
                  %439 = vst [vmem:[%s387 + $0xc8] sm:$0xff] %v438
                  %v440 = vld [vmem:[%s386 + $0x1a0] sm:$0xff]
                  %441 = vst [vmem:[%s387 + $0xd0] sm:$0xff] %v440
                  %v442 = vld [vmem:[%s386 + $0x1b0] sm:$0xff]
                  %443 = vst [vmem:[%s387 + $0xd8] sm:$0xff] %v442
                  %v444 = vld [vmem:[%s386 + $0x1c0] sm:$0xff]
                  %445 = vst [vmem:[%s387 + $0xe0] sm:$0xff] %v444
                  %v446 = vld [vmem:[%s386 + $0x1d0] sm:$0xff]
                  %447 = vst [vmem:[%s387 + $0xe8] sm:$0xff] %v446
                  %v448 = vld [vmem:[%s386 + $0x1e0] sm:$0xff]
                  %449 = vst [vmem:[%s387 + $0xf0] sm:$0xff] %v448
                  %v450 = vld [vmem:[%s386 + $0x1f0] sm:$0xff]
                  %451 = vst [vmem:[%s387 + $0xf8] sm:$0xff] %v450
                $region72: #{grace_forward.5} parent=66 // loop_footer
                  %s385 = sadd.s32 1, %s381
                $region73: #{grace_forward.5} parent=66 // loop_footer_branch
                  %380 = sbr.rel target = $region69
                $region74: #{grace_forward.5} parent=66 // loop_exit
                  _
              $region67: #{grace_forward.5} parent=51 // pred_fallthru
                _
              // Predicated region
              $region75: #{grace_forward.5} parent=51 // pred_check
                _
              $region76: #{grace_forward.5} parent=51 // pred_check_branch
                %453 = sbr.rel target = $region78
              $region77: #{grace_forward.5} parent=51 // pred_region
                _
              $region78: #{grace_forward.5} parent=51 // pred_fallthru
                _
            $region52: #{grace_forward.5} parent=47 // pred_fallthru
              _
            // Predicated region
            $region53: #{grace_forward.5} parent=47 // pred_check
              _
            $region54: #{grace_forward.5} parent=47 // pred_check_branch
              %303 = sbr.rel target = $region56
            $region55: #{grace_forward.5} parent=47 // pred_region
              %s305 = ssub.s32 256, 1
              loop: start=0, step=1, limit=1
              $region57: #{grace_forward.5} parent=55 // loop_pre_header
                _
              $region58: #{grace_forward.5} parent=55 // loop_header
                %s307 = sphi 0, %s311
                %p308 = scmp.ge.s32.totalorder %s307, 1
                %s312 = sphi %s297, %s297
                %s313 = sphi %s289, %s289
              $region59: #{grace_forward.5} parent=55 // loop_header_branch
                %310 = sbr.rel (%p308) target = $region63
              $region60: #{grace_forward.5} parent=55 // loop_body
                %v314 = vld [vmem:[%s312] sm:%s305]
                %315 = vst [vmem:[%s313] sm:%s305] %v314
                %v316 = vld [vmem:[%s312 + $0x10] sm:%s305]
                %317 = vst [vmem:[%s313 + $0x8] sm:%s305] %v316
                %v318 = vld [vmem:[%s312 + $0x20] sm:%s305]
                %319 = vst [vmem:[%s313 + $0x10] sm:%s305] %v318
                %v320 = vld [vmem:[%s312 + $0x30] sm:%s305]
                %321 = vst [vmem:[%s313 + $0x18] sm:%s305] %v320
                %v322 = vld [vmem:[%s312 + $0x40] sm:%s305]
                %323 = vst [vmem:[%s313 + $0x20] sm:%s305] %v322
                %v324 = vld [vmem:[%s312 + $0x50] sm:%s305]
                %325 = vst [vmem:[%s313 + $0x28] sm:%s305] %v324
                %v326 = vld [vmem:[%s312 + $0x60] sm:%s305]
                %327 = vst [vmem:[%s313 + $0x30] sm:%s305] %v326
                %v328 = vld [vmem:[%s312 + $0x70] sm:%s305]
                %329 = vst [vmem:[%s313 + $0x38] sm:%s305] %v328
                %v330 = vld [vmem:[%s312 + $0x80] sm:%s305]
                %331 = vst [vmem:[%s313 + $0x40] sm:%s305] %v330
                %v332 = vld [vmem:[%s312 + $0x90] sm:%s305]
                %333 = vst [vmem:[%s313 + $0x48] sm:%s305] %v332
                %v334 = vld [vmem:[%s312 + $0xa0] sm:%s305]
                %335 = vst [vmem:[%s313 + $0x50] sm:%s305] %v334
                %v336 = vld [vmem:[%s312 + $0xb0] sm:%s305]
                %337 = vst [vmem:[%s313 + $0x58] sm:%s305] %v336
                %v338 = vld [vmem:[%s312 + $0xc0] sm:%s305]
                %339 = vst [vmem:[%s313 + $0x60] sm:%s305] %v338
                %v340 = vld [vmem:[%s312 + $0xd0] sm:%s305]
                %341 = vst [vmem:[%s313 + $0x68] sm:%s305] %v340
                %v342 = vld [vmem:[%s312 + $0xe0] sm:%s305]
                %343 = vst [vmem:[%s313 + $0x70] sm:%s305] %v342
                %v344 = vld [vmem:[%s312 + $0xf0] sm:%s305]
                %345 = vst [vmem:[%s313 + $0x78] sm:%s305] %v344
                %v346 = vld [vmem:[%s312 + $0x100] sm:%s305]
                %347 = vst [vmem:[%s313 + $0x80] sm:%s305] %v346
                %v348 = vld [vmem:[%s312 + $0x110] sm:%s305]
                %349 = vst [vmem:[%s313 + $0x88] sm:%s305] %v348
                %v350 = vld [vmem:[%s312 + $0x120] sm:%s305]
                %351 = vst [vmem:[%s313 + $0x90] sm:%s305] %v350
                %v352 = vld [vmem:[%s312 + $0x130] sm:%s305]
                %353 = vst [vmem:[%s313 + $0x98] sm:%s305] %v352
                %v354 = vld [vmem:[%s312 + $0x140] sm:%s305]
                %355 = vst [vmem:[%s313 + $0xa0] sm:%s305] %v354
                %v356 = vld [vmem:[%s312 + $0x150] sm:%s305]
                %357 = vst [vmem:[%s313 + $0xa8] sm:%s305] %v356
                %v358 = vld [vmem:[%s312 + $0x160] sm:%s305]
                %359 = vst [vmem:[%s313 + $0xb0] sm:%s305] %v358
                %v360 = vld [vmem:[%s312 + $0x170] sm:%s305]
                %361 = vst [vmem:[%s313 + $0xb8] sm:%s305] %v360
                %v362 = vld [vmem:[%s312 + $0x180] sm:%s305]
                %363 = vst [vmem:[%s313 + $0xc0] sm:%s305] %v362
                %v364 = vld [vmem:[%s312 + $0x190] sm:%s305]
                %365 = vst [vmem:[%s313 + $0xc8] sm:%s305] %v364
                %v366 = vld [vmem:[%s312 + $0x1a0] sm:%s305]
                %367 = vst [vmem:[%s313 + $0xd0] sm:%s305] %v366
                %v368 = vld [vmem:[%s312 + $0x1b0] sm:%s305]
                %369 = vst [vmem:[%s313 + $0xd8] sm:%s305] %v368
                %v370 = vld [vmem:[%s312 + $0x1c0] sm:%s305]
                %371 = vst [vmem:[%s313 + $0xe0] sm:%s305] %v370
                %v372 = vld [vmem:[%s312 + $0x1d0] sm:%s305]
                %373 = vst [vmem:[%s313 + $0xe8] sm:%s305] %v372
                %v374 = vld [vmem:[%s312 + $0x1e0] sm:%s305]
                %375 = vst [vmem:[%s313 + $0xf0] sm:%s305] %v374
                %v376 = vld [vmem:[%s312 + $0x1f0] sm:%s305]
                %377 = vst [vmem:[%s313 + $0xf8] sm:%s305] %v376
              $region61: #{grace_forward.5} parent=55 // loop_footer
                %s311 = sadd.s32 1, %s307
              $region62: #{grace_forward.5} parent=55 // loop_footer_branch
                %306 = sbr.rel target = $region58
              $region63: #{grace_forward.5} parent=55 // loop_exit
                _
            $region56: #{grace_forward.5} parent=47 // pred_fallthru
              _
          $region48: #{grace_forward.5} parent=43 // pred_fallthru
            _
          %454 = vnop
        $region44: #{grace_forward.5} parent=39 // pred_fallthru
          _
        // Predicated region
        $region79: #{grace_forward.5} parent=39 // pred_check
          %p455 = pneg %p107
        $region80: #{grace_forward.5} parent=39 // pred_check_branch
          %457 = sbr.rel (%p455) target = $region82
        $region81: #{grace_forward.5} parent=39 // pred_region
          %s458 = smul.u32 32, %s24
          %p459 = scmp.lt.s32.totalorder %s22, 1
          %s460 = scalar_select %p459, %s22, 1
          %p461 = scmp.lt.s32.totalorder %s458, 63
          %s462 = scalar_select %p461, %s458, 63
          %s463 = smul.addr %s460, 64
          %s464 = sadd.s32 %s462, %s463
          %s465 = smul.addr %s464, 4
          %s466 = scalar_lea.vmem %s2, %s465
          %s467 = smul.u32 32, %s24
        $region82: #{grace_forward.5} parent=39 // pred_fallthru
          _
      $region40: #{grace_forward.5} parent=5 // pred_fallthru
        _
      %p468 = scmp.le.s32.totalorder 1, %s15
      %p469 = scmp.lt.s32.totalorder %s15, 9
      %p470 = pnand %p468, %p469
      %p471 = pneg %p470
      // Predicated region
      $region83: #{grace_forward.5} parent=5 // pred_check
        _
      $region84: #{grace_forward.5} parent=5 // pred_check_branch
        %473 = sbr.rel (%p470) target = $region86
      $region85: #{grace_forward.5} parent=5 // pred_region
        %s474 = ssub.s32 %s15, 1
        %s475 = sand.u32 %s72, 1
        %s476 = sand.u32 %s72, 1
        %s477 = smul.addr %s476, 256
        %s478 = scalar_lea.vmem [#allocation4], %s477
        // Predicated region
        $region87: #{grace_forward.5} parent=85 // pred_check
          %p479 = pneg %p85
        $region88: #{grace_forward.5} parent=85 // pred_check_branch
          %481 = sbr.rel (%p479) target = $region90
        $region89: #{grace_forward.5} parent=85 // pred_region
          _
        $region90: #{grace_forward.5} parent=85 // pred_fallthru
          _
        %p482 = pneg %p55
        %p483 = pneg %p52
        %s484 = sand.u32 %s72, 1
        %s485 = sand.u32 %s72, 1
        %s486 = smul.addr %s485, 256
        %s487 = scalar_lea.vmem [#allocation4], %s486
        %p488 = pneg %p85
        %p489 = pneg %p82
        %s490 = smul.u32 32, %s27
        %p491 = scmp.lt.s32.totalorder %s25, 1
        %s492 = scalar_select %p491, %s25, 1
        %p493 = scmp.lt.s32.totalorder %s490, 63
        %s494 = scalar_select %p493, %s490, 63
        %s495 = smul.addr %s492, 64
        %s496 = sadd.s32 %s494, %s495
        %s497 = smul.addr %s496, 4
        %s498 = scalar_lea.vmem %s2, %s497
        %p499 = pneg %p113
        %p500 = pneg %p110
        %p501 = pneg %p134
        %p502 = pneg %p131
        %p503 = pneg %p155
        %p504 = pneg %p152
        %p505 = pneg %p176
        %p506 = pneg %p173
        %p507 = pneg %p197
        %p508 = pneg %p194
        %p509 = pneg %p218
        %p510 = pneg %p215
        %p511 = pneg %p246
        %p512 = pneg %p243
        %s513 = smul.u32 32, %s26
        %p514 = scmp.lt.s32.totalorder %s25, 1
        %s515 = scalar_select %p514, %s25, 1
        %p516 = scmp.lt.s32.totalorder %s513, 63
        %s517 = scalar_select %p516, %s513, 63
        %s518 = smul.addr %s515, 64
        %s519 = sadd.s32 %s517, %s518
        %s520 = smul.addr %s519, 8
        %s521 = scalar_lea.vmem %s8, %s520
        %s522 = smul.u32 32, %s26
        %s523 = smul.u32 2, %s27
        %s524 = smul.u32 32, %s27
        %p525 = scmp.lt.s32.totalorder %s25, 1
        %s526 = scalar_select %p525, %s25, 1
        %p527 = scmp.lt.s32.totalorder %s524, 63
        %s528 = scalar_select %p527, %s524, 63
        %s529 = smul.addr %s526, 64
        %s530 = sadd.s32 %s528, %s529
        %s531 = smul.addr %s530, 4
        %s532 = scalar_lea.vmem %s2, %s531
        %s533 = smul.u32 32, %s27
        %s534 = smul.u32 32, %s26
        %p535 = scmp.lt.s32.totalorder %s25, 1
        %s536 = scalar_select %p535, %s25, 1
        %p537 = scmp.lt.s32.totalorder %s534, 63
        %s538 = scalar_select %p537, %s534, 63
        %s539 = smul.addr %s536, 64
        %s540 = sadd.s32 %s538, %s539
        %s541 = smul.addr %s540, 8
        %s542 = scalar_lea.vmem %s8, %s541
        %s543 = smul.u32 32, %s26
        %p545 = scmp.eq.s32.totalorder %s27, 0
        // Predicated region
        $region91: #{grace_forward.5} parent=85 // pred_check
          %p546 = pneg %p545
        $region92: #{grace_forward.5} parent=85 // pred_check_branch
          %548 = sbr.rel (%p546) target = $region94
        $region93: #{grace_forward.5} parent=85 // pred_region
          %549 = vst [vmem:[#allocation2] sm:$0xff] 0.0
          %550 = vst [vmem:[#allocation2 + $0x8] sm:$0xff] 0.0
          %551 = vst [vmem:[#allocation2 + $0x10] sm:$0xff] 0.0
          %552 = vst [vmem:[#allocation2 + $0x18] sm:$0xff] 0.0
          %553 = vst [vmem:[#allocation2 + $0x20] sm:$0xff] 0.0
          %554 = vst [vmem:[#allocation2 + $0x28] sm:$0xff] 0.0
          %555 = vst [vmem:[#allocation2 + $0x30] sm:$0xff] 0.0
          %556 = vst [vmem:[#allocation2 + $0x38] sm:$0xff] 0.0
          %557 = vst [vmem:[#allocation2 + $0x40] sm:$0xff] 0.0
          %558 = vst [vmem:[#allocation2 + $0x48] sm:$0xff] 0.0
          %559 = vst [vmem:[#allocation2 + $0x50] sm:$0xff] 0.0
          %560 = vst [vmem:[#allocation2 + $0x58] sm:$0xff] 0.0
          %561 = vst [vmem:[#allocation2 + $0x60] sm:$0xff] 0.0
          %562 = vst [vmem:[#allocation2 + $0x68] sm:$0xff] 0.0
          %563 = vst [vmem:[#allocation2 + $0x70] sm:$0xff] 0.0
          %564 = vst [vmem:[#allocation2 + $0x78] sm:$0xff] 0.0
          %565 = vst [vmem:[#allocation2 + $0x80] sm:$0xff] 0.0
          %566 = vst [vmem:[#allocation2 + $0x88] sm:$0xff] 0.0
          %567 = vst [vmem:[#allocation2 + $0x90] sm:$0xff] 0.0
          %568 = vst [vmem:[#allocation2 + $0x98] sm:$0xff] 0.0
          %569 = vst [vmem:[#allocation2 + $0xa0] sm:$0xff] 0.0
          %570 = vst [vmem:[#allocation2 + $0xa8] sm:$0xff] 0.0
          %571 = vst [vmem:[#allocation2 + $0xb0] sm:$0xff] 0.0
          %572 = vst [vmem:[#allocation2 + $0xb8] sm:$0xff] 0.0
          %573 = vst [vmem:[#allocation2 + $0xc0] sm:$0xff] 0.0
          %574 = vst [vmem:[#allocation2 + $0xc8] sm:$0xff] 0.0
          %575 = vst [vmem:[#allocation2 + $0xd0] sm:$0xff] 0.0
          %576 = vst [vmem:[#allocation2 + $0xd8] sm:$0xff] 0.0
          %577 = vst [vmem:[#allocation2 + $0xe0] sm:$0xff] 0.0
          %578 = vst [vmem:[#allocation2 + $0xe8] sm:$0xff] 0.0
          %579 = vst [vmem:[#allocation2 + $0xf0] sm:$0xff] 0.0
          %580 = vst [vmem:[#allocation2 + $0xf8] sm:$0xff] 0.0
        $region94: #{grace_forward.5} parent=85 // pred_fallthru
          _
        %v581 = vld [vmem:[#allocation2] sm:$0xff]
        %v582 = vld [vmem:[#allocation2 + $0x8] sm:$0xff]
        %v583 = vld [vmem:[#allocation2 + $0x10] sm:$0xff]
        %v584 = vld [vmem:[#allocation2 + $0x18] sm:$0xff]
        %v585 = vld [vmem:[#allocation2 + $0x20] sm:$0xff]
        %v586 = vld [vmem:[#allocation2 + $0x28] sm:$0xff]
        %v587 = vld [vmem:[#allocation2 + $0x30] sm:$0xff]
        %v588 = vld [vmem:[#allocation2 + $0x38] sm:$0xff]
        %v589 = vld [vmem:[#allocation2 + $0x40] sm:$0xff]
        %v590 = vld [vmem:[#allocation2 + $0x48] sm:$0xff]
        %v591 = vld [vmem:[#allocation2 + $0x50] sm:$0xff]
        %v592 = vld [vmem:[#allocation2 + $0x58] sm:$0xff]
        %v593 = vld [vmem:[#allocation2 + $0x60] sm:$0xff]
        %v594 = vld [vmem:[#allocation2 + $0x68] sm:$0xff]
        %v595 = vld [vmem:[#allocation2 + $0x70] sm:$0xff]
        %v596 = vld [vmem:[#allocation2 + $0x78] sm:$0xff]
        %v597 = vld [vmem:[#allocation2 + $0x80] sm:$0xff]
        %v598 = vld [vmem:[#allocation2 + $0x88] sm:$0xff]
        %v599 = vld [vmem:[#allocation2 + $0x90] sm:$0xff]
        %v600 = vld [vmem:[#allocation2 + $0x98] sm:$0xff]
        %v601 = vld [vmem:[#allocation2 + $0xa0] sm:$0xff]
        %v602 = vld [vmem:[#allocation2 + $0xa8] sm:$0xff]
        %v603 = vld [vmem:[#allocation2 + $0xb0] sm:$0xff]
        %v604 = vld [vmem:[#allocation2 + $0xb8] sm:$0xff]
        %v605 = vld [vmem:[#allocation2 + $0xc0] sm:$0xff]
        %v606 = vld [vmem:[#allocation2 + $0xc8] sm:$0xff]
        %v607 = vld [vmem:[#allocation2 + $0xd0] sm:$0xff]
        %v608 = vld [vmem:[#allocation2 + $0xd8] sm:$0xff]
        %v609 = vld [vmem:[#allocation2 + $0xe0] sm:$0xff]
        %v610 = vld [vmem:[#allocation2 + $0xe8] sm:$0xff]
        %v611 = vld [vmem:[#allocation2 + $0xf0] sm:$0xff]
        %v612 = vld [vmem:[#allocation2 + $0xf8] sm:$0xff]
        %v613 = vld [vmem:[%s478] sm:$0xff]
        %v614 = vld [vmem:[%s478 + $0x8] sm:$0xff]
        %v615 = vld [vmem:[%s478 + $0x10] sm:$0xff]
        %v616 = vld [vmem:[%s478 + $0x18] sm:$0xff]
        %v617 = vld [vmem:[%s478 + $0x20] sm:$0xff]
        %v618 = vld [vmem:[%s478 + $0x28] sm:$0xff]
        %v619 = vld [vmem:[%s478 + $0x30] sm:$0xff]
        %v620 = vld [vmem:[%s478 + $0x38] sm:$0xff]
        %v621 = vld [vmem:[%s478 + $0x40] sm:$0xff]
        %v622 = vld [vmem:[%s478 + $0x48] sm:$0xff]
        %v623 = vld [vmem:[%s478 + $0x50] sm:$0xff]
        %v624 = vld [vmem:[%s478 + $0x58] sm:$0xff]
        %v625 = vld [vmem:[%s478 + $0x60] sm:$0xff]
        %v626 = vld [vmem:[%s478 + $0x68] sm:$0xff]
        %v627 = vld [vmem:[%s478 + $0x70] sm:$0xff]
        %v628 = vld [vmem:[%s478 + $0x78] sm:$0xff]
        %v629 = vld [vmem:[%s478 + $0x80] sm:$0xff]
        %v630 = vld [vmem:[%s478 + $0x88] sm:$0xff]
        %v631 = vld [vmem:[%s478 + $0x90] sm:$0xff]
        %v632 = vld [vmem:[%s478 + $0x98] sm:$0xff]
        %v633 = vld [vmem:[%s478 + $0xa0] sm:$0xff]
        %v634 = vld [vmem:[%s478 + $0xa8] sm:$0xff]
        %v635 = vld [vmem:[%s478 + $0xb0] sm:$0xff]
        %v636 = vld [vmem:[%s478 + $0xb8] sm:$0xff]
        %v637 = vld [vmem:[%s478 + $0xc0] sm:$0xff]
        %v638 = vld [vmem:[%s478 + $0xc8] sm:$0xff]
        %v639 = vld [vmem:[%s478 + $0xd0] sm:$0xff]
        %v640 = vld [vmem:[%s478 + $0xd8] sm:$0xff]
        %v641 = vld [vmem:[%s478 + $0xe0] sm:$0xff]
        %v642 = vld [vmem:[%s478 + $0xe8] sm:$0xff]
        %v643 = vld [vmem:[%s478 + $0xf0] sm:$0xff]
        %v644 = vld [vmem:[%s478 + $0xf8] sm:$0xff]
        %v645 = vld [vmem:[%s532] sm:$0xf]
        %v646 = vld [vmem:[%s532 + $0x4] sm:$0xf]
        %v647 = vld [vmem:[%s532 + $0x8] sm:$0xf]
        %v648 = vld [vmem:[%s532 + $0xc] sm:$0xf]
        %v649 = vld [vmem:[%s532 + $0x10] sm:$0xf]
        %v650 = vld [vmem:[%s532 + $0x14] sm:$0xf]
        %v651 = vld [vmem:[%s532 + $0x18] sm:$0xf]
        %v652 = vld [vmem:[%s532 + $0x1c] sm:$0xf]
        %v653 = vld [vmem:[%s532 + $0x20] sm:$0xf]
        %v654 = vld [vmem:[%s532 + $0x24] sm:$0xf]
        %v655 = vld [vmem:[%s532 + $0x28] sm:$0xf]
        %v656 = vld [vmem:[%s532 + $0x2c] sm:$0xf]
        %v657 = vld [vmem:[%s532 + $0x30] sm:$0xf]
        %v658 = vld [vmem:[%s532 + $0x34] sm:$0xf]
        %v659 = vld [vmem:[%s532 + $0x38] sm:$0xf]
        %v660 = vld [vmem:[%s532 + $0x3c] sm:$0xf]
        %v661 = vld [vmem:[%s532 + $0x40] sm:$0xf]
        %v662 = vld [vmem:[%s532 + $0x44] sm:$0xf]
        %v663 = vld [vmem:[%s532 + $0x48] sm:$0xf]
        %v664 = vld [vmem:[%s532 + $0x4c] sm:$0xf]
        %v665 = vld [vmem:[%s532 + $0x50] sm:$0xf]
        %v666 = vld [vmem:[%s532 + $0x54] sm:$0xf]
        %v667 = vld [vmem:[%s532 + $0x58] sm:$0xf]
        %v668 = vld [vmem:[%s532 + $0x5c] sm:$0xf]
        %v669 = vld [vmem:[%s532 + $0x60] sm:$0xf]
        %v670 = vld [vmem:[%s532 + $0x64] sm:$0xf]
        %v671 = vld [vmem:[%s532 + $0x68] sm:$0xf]
        %v672 = vld [vmem:[%s532 + $0x6c] sm:$0xf]
        %v673 = vld [vmem:[%s532 + $0x70] sm:$0xf]
        %v674 = vld [vmem:[%s532 + $0x74] sm:$0xf]
        %v675 = vld [vmem:[%s532 + $0x78] sm:$0xf]
        %v676 = vld [vmem:[%s532 + $0x7c] sm:$0xf]
        %v709 = vunpack.c.l.b16 %v613
        %v710 = vunpack.c.h.b16 %v613
        %v711 = vunpack.c.l.b16 %v614
        %v712 = vunpack.c.h.b16 %v614
        %v713 = vunpack.c.l.b16 %v615
        %v714 = vunpack.c.h.b16 %v615
        %v715 = vunpack.c.l.b16 %v616
        %v716 = vunpack.c.h.b16 %v616
        %v717 = vunpack.c.l.b16 %v617
        %v718 = vunpack.c.h.b16 %v617
        %v719 = vunpack.c.l.b16 %v618
        %v720 = vunpack.c.h.b16 %v618
        %v721 = vunpack.c.l.b16 %v619
        %v722 = vunpack.c.h.b16 %v619
        %v723 = vunpack.c.l.b16 %v620
        %v724 = vunpack.c.h.b16 %v620
        %v725 = vunpack.c.l.b16 %v621
        %v726 = vunpack.c.h.b16 %v621
        %v727 = vunpack.c.l.b16 %v622
        %v728 = vunpack.c.h.b16 %v622
        %v729 = vunpack.c.l.b16 %v623
        %v730 = vunpack.c.h.b16 %v623
        %v731 = vunpack.c.l.b16 %v624
        %v732 = vunpack.c.h.b16 %v624
        %v733 = vunpack.c.l.b16 %v625
        %v734 = vunpack.c.h.b16 %v625
        %v735 = vunpack.c.l.b16 %v626
        %v736 = vunpack.c.h.b16 %v626
        %v737 = vunpack.c.l.b16 %v627
        %v738 = vunpack.c.h.b16 %v627
        %v739 = vunpack.c.l.b16 %v628
        %v740 = vunpack.c.h.b16 %v628
        %v741 = vunpack.c.l.b16 %v629
        %v742 = vunpack.c.h.b16 %v629
        %v743 = vunpack.c.l.b16 %v630
        %v744 = vunpack.c.h.b16 %v630
        %v745 = vunpack.c.l.b16 %v631
        %v746 = vunpack.c.h.b16 %v631
        %v747 = vunpack.c.l.b16 %v632
        %v748 = vunpack.c.h.b16 %v632
        %v749 = vunpack.c.l.b16 %v633
        %v750 = vunpack.c.h.b16 %v633
        %v751 = vunpack.c.l.b16 %v634
        %v752 = vunpack.c.h.b16 %v634
        %v753 = vunpack.c.l.b16 %v635
        %v754 = vunpack.c.h.b16 %v635
        %v755 = vunpack.c.l.b16 %v636
        %v756 = vunpack.c.h.b16 %v636
        %v757 = vunpack.c.l.b16 %v637
        %v758 = vunpack.c.h.b16 %v637
        %v759 = vunpack.c.l.b16 %v638
        %v760 = vunpack.c.h.b16 %v638
        %v761 = vunpack.c.l.b16 %v639
        %v762 = vunpack.c.h.b16 %v639
        %v763 = vunpack.c.l.b16 %v640
        %v764 = vunpack.c.h.b16 %v640
        %v765 = vunpack.c.l.b16 %v641
        %v766 = vunpack.c.h.b16 %v641
        %v767 = vunpack.c.l.b16 %v642
        %v768 = vunpack.c.h.b16 %v642
        %v769 = vunpack.c.l.b16 %v643
        %v770 = vunpack.c.h.b16 %v643
        %v771 = vunpack.c.l.b16 %v644
        %v772 = vunpack.c.h.b16 %v644
        %v773 = vpack.c.b16 %v711, %v709
        %v774 = vpack.c.b16 %v712, %v710
        %v775 = vpack.c.b16 %v715, %v713
        %v776 = vpack.c.b16 %v716, %v714
        %v777 = vpack.c.b16 %v719, %v717
        %v778 = vpack.c.b16 %v720, %v718
        %v779 = vpack.c.b16 %v723, %v721
        %v780 = vpack.c.b16 %v724, %v722
        %v781 = vpack.c.b16 %v727, %v725
        %v782 = vpack.c.b16 %v728, %v726
        %v783 = vpack.c.b16 %v731, %v729
        %v784 = vpack.c.b16 %v732, %v730
        %v785 = vpack.c.b16 %v735, %v733
        %v786 = vpack.c.b16 %v736, %v734
        %v787 = vpack.c.b16 %v739, %v737
        %v788 = vpack.c.b16 %v740, %v738
        %v789 = vpack.c.b16 %v743, %v741
        %v790 = vpack.c.b16 %v744, %v742
        %v791 = vpack.c.b16 %v747, %v745
        %v792 = vpack.c.b16 %v748, %v746
        %v793 = vpack.c.b16 %v751, %v749
        %v794 = vpack.c.b16 %v752, %v750
        %v795 = vpack.c.b16 %v755, %v753
        %v796 = vpack.c.b16 %v756, %v754
        %v797 = vpack.c.b16 %v759, %v757
        %v798 = vpack.c.b16 %v760, %v758
        %v799 = vpack.c.b16 %v763, %v761
        %v800 = vpack.c.b16 %v764, %v762
        %v801 = vpack.c.b16 %v767, %v765
        %v802 = vpack.c.b16 %v768, %v766
        %v803 = vpack.c.b16 %v771, %v769
        %v804 = vpack.c.b16 %v772, %v770
        %v869 = vunpack.c.l.b16 %v645
        %v870 = vunpack.c.l.b16 %v646
        %v871 = vunpack.c.l.b16 %v647
        %v872 = vunpack.c.l.b16 %v648
        %v873 = vunpack.c.l.b16 %v649
        %v874 = vunpack.c.l.b16 %v650
        %v875 = vunpack.c.l.b16 %v651
        %v876 = vunpack.c.l.b16 %v652
        %v877 = vunpack.c.l.b16 %v653
        %v878 = vunpack.c.l.b16 %v654
        %v879 = vunpack.c.l.b16 %v655
        %v880 = vunpack.c.l.b16 %v656
        %v881 = vunpack.c.l.b16 %v657
        %v882 = vunpack.c.l.b16 %v658
        %v883 = vunpack.c.l.b16 %v659
        %v884 = vunpack.c.l.b16 %v660
        %v885 = vunpack.c.l.b16 %v661
        %v886 = vunpack.c.l.b16 %v662
        %v887 = vunpack.c.l.b16 %v663
        %v888 = vunpack.c.l.b16 %v664
        %v889 = vunpack.c.l.b16 %v665
        %v890 = vunpack.c.l.b16 %v666
        %v891 = vunpack.c.l.b16 %v667
        %v892 = vunpack.c.l.b16 %v668
        %v893 = vunpack.c.l.b16 %v669
        %v894 = vunpack.c.l.b16 %v670
        %v895 = vunpack.c.l.b16 %v671
        %v896 = vunpack.c.l.b16 %v672
        %v897 = vunpack.c.l.b16 %v673
        %v898 = vunpack.c.l.b16 %v674
        %v899 = vunpack.c.l.b16 %v675
        %v900 = vunpack.c.l.b16 %v676
        %v901 = vpack.c.b16 %v870, %v869
        %v902 = vpack.c.b16 %v872, %v871
        %v903 = vpack.c.b16 %v874, %v873
        %v904 = vpack.c.b16 %v876, %v875
        %v905 = vpack.c.b16 %v878, %v877
        %v906 = vpack.c.b16 %v880, %v879
        %v907 = vpack.c.b16 %v882, %v881
        %v908 = vpack.c.b16 %v884, %v883
        %v909 = vpack.c.b16 %v886, %v885
        %v910 = vpack.c.b16 %v888, %v887
        %v911 = vpack.c.b16 %v890, %v889
        %v912 = vpack.c.b16 %v892, %v891
        %v913 = vpack.c.b16 %v894, %v893
        %v914 = vpack.c.b16 %v896, %v895
        %v915 = vpack.c.b16 %v898, %v897
        %v916 = vpack.c.b16 %v900, %v899
        %933 = vmatprep.subr.bf16.mxu0 0
        %934 = vmatpush1.bf16.msra.mxu0 %v908
        %935 = vmatprep.subr.bf16.mxu0 0
        %936 = vmatpush1.bf16.msra.mxu0 %v907
        %937 = vmatprep.subr.bf16.mxu0 0
        %938 = vmatpush1.bf16.msra.mxu0 %v906
        %939 = vmatprep.subr.bf16.mxu0 0
        %940 = vmatpush1.bf16.msra.mxu0 %v905
        %941 = vmatprep.subr.bf16.mxu0 0
        %942 = vmatpush1.bf16.msra.mxu0 %v904
        %943 = vmatprep.subr.bf16.mxu0 0
        %944 = vmatpush1.bf16.msra.mxu0 %v903
        %945 = vmatprep.subr.bf16.mxu0 0
        %946 = vmatpush1.bf16.msra.mxu0 %v902
        %947 = vmatprep.subr.bf16.mxu0 0
        %948 = vmatpush1.bf16.msra.mxu0 %v901
        %949 = vmatprep.subr.bf16.mxu0 0
        %950 = vmatpush2.bf16.msra.mxu0 %v916
        %951 = vmatprep.subr.bf16.mxu0 0
        %952 = vmatpush2.bf16.msra.mxu0 %v915
        %953 = vmatprep.subr.bf16.mxu0 0
        %954 = vmatpush2.bf16.msra.mxu0 %v914
        %955 = vmatprep.subr.bf16.mxu0 0
        %956 = vmatpush2.bf16.msra.mxu0 %v913
        %957 = vmatprep.subr.bf16.mxu0 0
        %958 = vmatpush2.bf16.msra.mxu0 %v912
        %959 = vmatprep.subr.bf16.mxu0 0
        %960 = vmatpush2.bf16.msra.mxu0 %v911
        %961 = vmatprep.subr.bf16.mxu0 0
        %962 = vmatpush2.bf16.msra.mxu0 %v910
        %963 = vmatprep.subr.bf16.mxu0 0
        %964 = vmatpush2.bf16.msra.mxu0 %v909
        %965 = vmatprep.mubr.bf16.mxu0 %v774
        %966 = vmatmul.mubr.bf16.gmra.mxu0 %v773
        %v967 = vpop.f32.mrf.mxu0
        %v968 = vadd.f32 0.0, %v967
        %v969 = vpop.f32.mrf.mxu0
        %v970 = vpop.f32.mrf.mxu0
        %v971 = vadd.f32 0.0, %v970
        %v972 = vpop.f32.mrf.mxu0
        %973 = vmatprep.mubr.bf16.mxu0 %v776
        %974 = vmatmul.mubr.bf16.gmra.mxu0 %v775
        %v975 = vpop.f32.mrf.mxu0
        %v976 = vadd.f32 0.0, %v975
        %v977 = vpop.f32.mrf.mxu0
        %v978 = vpop.f32.mrf.mxu0
        %v979 = vadd.f32 0.0, %v978
        %v980 = vpop.f32.mrf.mxu0
        %981 = vmatprep.mubr.bf16.mxu0 %v778
        %982 = vmatmul.mubr.bf16.gmra.mxu0 %v777
        %v983 = vpop.f32.mrf.mxu0
        %v984 = vadd.f32 0.0, %v983
        %v985 = vpop.f32.mrf.mxu0
        %v986 = vpop.f32.mrf.mxu0
        %v987 = vadd.f32 0.0, %v986
        %v988 = vpop.f32.mrf.mxu0
        %989 = vmatprep.mubr.bf16.mxu0 %v780
        %990 = vmatmul.mubr.bf16.gmra.mxu0 %v779
        %v991 = vpop.f32.mrf.mxu0
        %v992 = vadd.f32 0.0, %v991
        %v993 = vpop.f32.mrf.mxu0
        %v994 = vpop.f32.mrf.mxu0
        %v995 = vadd.f32 0.0, %v994
        %v996 = vpop.f32.mrf.mxu0
        %997 = vmatprep.mubr.bf16.mxu0 %v782
        %998 = vmatmul.mubr.bf16.gmra.mxu0 %v781
        %v999 = vpop.f32.mrf.mxu0
        %v1000 = vadd.f32 0.0, %v999
        %v1001 = vpop.f32.mrf.mxu0
        %v1002 = vpop.f32.mrf.mxu0
        %v1003 = vadd.f32 0.0, %v1002
        %v1004 = vpop.f32.mrf.mxu0
        %1005 = vmatprep.mubr.bf16.mxu0 %v784
        %1006 = vmatmul.mubr.bf16.gmra.mxu0 %v783
        %v1007 = vpop.f32.mrf.mxu0
        %v1008 = vadd.f32 0.0, %v1007
        %v1009 = vpop.f32.mrf.mxu0
        %v1010 = vpop.f32.mrf.mxu0
        %v1011 = vadd.f32 0.0, %v1010
        %v1012 = vpop.f32.mrf.mxu0
        %1013 = vmatprep.mubr.bf16.mxu0 %v786
        %1014 = vmatmul.mubr.bf16.gmra.mxu0 %v785
        %v1015 = vpop.f32.mrf.mxu0
        %v1016 = vadd.f32 0.0, %v1015
        %v1017 = vpop.f32.mrf.mxu0
        %v1018 = vpop.f32.mrf.mxu0
        %v1019 = vadd.f32 0.0, %v1018
        %v1020 = vpop.f32.mrf.mxu0
        %1021 = vmatprep.mubr.bf16.mxu0 %v788
        %1022 = vmatmul.mubr.bf16.gmra.mxu0 %v787
        %v1023 = vpop.f32.mrf.mxu0
        %v1024 = vadd.f32 0.0, %v1023
        %v1025 = vpop.f32.mrf.mxu0
        %v1026 = vpop.f32.mrf.mxu0
        %v1027 = vadd.f32 0.0, %v1026
        %v1028 = vpop.f32.mrf.mxu0
        %1029 = vmatprep.mubr.bf16.mxu0 %v790
        %1030 = vmatmul.mubr.bf16.gmra.mxu0 %v789
        %v1031 = vpop.f32.mrf.mxu0
        %v1032 = vadd.f32 0.0, %v1031
        %v1033 = vpop.f32.mrf.mxu0
        %v1034 = vpop.f32.mrf.mxu0
        %v1035 = vadd.f32 0.0, %v1034
        %v1036 = vpop.f32.mrf.mxu0
        %1037 = vmatprep.mubr.bf16.mxu0 %v792
        %1038 = vmatmul.mubr.bf16.gmra.mxu0 %v791
        %v1039 = vpop.f32.mrf.mxu0
        %v1040 = vadd.f32 0.0, %v1039
        %v1041 = vpop.f32.mrf.mxu0
        %v1042 = vpop.f32.mrf.mxu0
        %v1043 = vadd.f32 0.0, %v1042
        %v1044 = vpop.f32.mrf.mxu0
        %1045 = vmatprep.mubr.bf16.mxu0 %v794
        %1046 = vmatmul.mubr.bf16.gmra.mxu0 %v793
        %v1047 = vpop.f32.mrf.mxu0
        %v1048 = vadd.f32 0.0, %v1047
        %v1049 = vpop.f32.mrf.mxu0
        %v1050 = vpop.f32.mrf.mxu0
        %v1051 = vadd.f32 0.0, %v1050
        %v1052 = vpop.f32.mrf.mxu0
        %1053 = vmatprep.mubr.bf16.mxu0 %v796
        %1054 = vmatmul.mubr.bf16.gmra.mxu0 %v795
        %v1055 = vpop.f32.mrf.mxu0
        %v1056 = vadd.f32 0.0, %v1055
        %v1057 = vpop.f32.mrf.mxu0
        %v1058 = vpop.f32.mrf.mxu0
        %v1059 = vadd.f32 0.0, %v1058
        %v1060 = vpop.f32.mrf.mxu0
        %1061 = vmatprep.mubr.bf16.mxu0 %v798
        %1062 = vmatmul.mubr.bf16.gmra.mxu0 %v797
        %v1063 = vpop.f32.mrf.mxu0
        %v1064 = vadd.f32 0.0, %v1063
        %v1065 = vpop.f32.mrf.mxu0
        %v1066 = vpop.f32.mrf.mxu0
        %v1067 = vadd.f32 0.0, %v1066
        %v1068 = vpop.f32.mrf.mxu0
        %1069 = vmatprep.mubr.bf16.mxu0 %v800
        %1070 = vmatmul.mubr.bf16.gmra.mxu0 %v799
        %v1071 = vpop.f32.mrf.mxu0
        %v1072 = vadd.f32 0.0, %v1071
        %v1073 = vpop.f32.mrf.mxu0
        %v1074 = vpop.f32.mrf.mxu0
        %v1075 = vadd.f32 0.0, %v1074
        %v1076 = vpop.f32.mrf.mxu0
        %1077 = vmatprep.mubr.bf16.mxu0 %v802
        %1078 = vmatmul.mubr.bf16.gmra.mxu0 %v801
        %v1079 = vpop.f32.mrf.mxu0
        %v1080 = vadd.f32 0.0, %v1079
        %v1081 = vpop.f32.mrf.mxu0
        %v1082 = vpop.f32.mrf.mxu0
        %v1083 = vadd.f32 0.0, %v1082
        %v1084 = vpop.f32.mrf.mxu0
        %1085 = vmatprep.mubr.bf16.mxu0 %v804
        %1086 = vmatmul.mubr.bf16.gmra.mxu0 %v803
        %v1087 = vpop.f32.mrf.mxu0
        %v1088 = vadd.f32 0.0, %v1087
        %v1089 = vpop.f32.mrf.mxu0
        %v1090 = vpop.f32.mrf.mxu0
        %v1091 = vadd.f32 0.0, %v1090
        %v1092 = vpop.f32.mrf.mxu0
        %1093 = vdwg.mxu0
        %v1094 = vadd.f32 %v581, %v968
        %v1095 = vadd.f32 %v582, %v971
        %v1096 = vadd.f32 %v583, %v976
        %v1097 = vadd.f32 %v584, %v979
        %v1098 = vadd.f32 %v585, %v984
        %v1099 = vadd.f32 %v586, %v987
        %v1100 = vadd.f32 %v587, %v992
        %v1101 = vadd.f32 %v588, %v995
        %v1102 = vadd.f32 %v589, %v1000
        %v1103 = vadd.f32 %v590, %v1003
        %v1104 = vadd.f32 %v591, %v1008
        %v1105 = vadd.f32 %v592, %v1011
        %v1106 = vadd.f32 %v593, %v1016
        %v1107 = vadd.f32 %v594, %v1019
        %v1108 = vadd.f32 %v595, %v1024
        %v1109 = vadd.f32 %v596, %v1027
        %v1110 = vadd.f32 %v597, %v1032
        %v1111 = vadd.f32 %v598, %v1035
        %v1112 = vadd.f32 %v599, %v1040
        %v1113 = vadd.f32 %v600, %v1043
        %v1114 = vadd.f32 %v601, %v1048
        %v1115 = vadd.f32 %v602, %v1051
        %v1116 = vadd.f32 %v603, %v1056
        %v1117 = vadd.f32 %v604, %v1059
        %v1118 = vadd.f32 %v605, %v1064
        %v1119 = vadd.f32 %v606, %v1067
        %v1120 = vadd.f32 %v607, %v1072
        %v1121 = vadd.f32 %v608, %v1075
        %v1122 = vadd.f32 %v609, %v1080
        %v1123 = vadd.f32 %v610, %v1083
        %v1124 = vadd.f32 %v611, %v1088
        %v1125 = vadd.f32 %v612, %v1091
        %1126 = vst [vmem:[#allocation2] sm:$0xff] %v1094
        %1127 = vst [vmem:[#allocation2 + $0x8] sm:$0xff] %v1095
        %1128 = vst [vmem:[#allocation2 + $0x10] sm:$0xff] %v1096
        %1129 = vst [vmem:[#allocation2 + $0x18] sm:$0xff] %v1097
        %1130 = vst [vmem:[#allocation2 + $0x20] sm:$0xff] %v1098
        %1131 = vst [vmem:[#allocation2 + $0x28] sm:$0xff] %v1099
        %1132 = vst [vmem:[#allocation2 + $0x30] sm:$0xff] %v1100
        %1133 = vst [vmem:[#allocation2 + $0x38] sm:$0xff] %v1101
        %1134 = vst [vmem:[#allocation2 + $0x40] sm:$0xff] %v1102
        %1135 = vst [vmem:[#allocation2 + $0x48] sm:$0xff] %v1103
        %1136 = vst [vmem:[#allocation2 + $0x50] sm:$0xff] %v1104
        %1137 = vst [vmem:[#allocation2 + $0x58] sm:$0xff] %v1105
        %1138 = vst [vmem:[#allocation2 + $0x60] sm:$0xff] %v1106
        %1139 = vst [vmem:[#allocation2 + $0x68] sm:$0xff] %v1107
        %1140 = vst [vmem:[#allocation2 + $0x70] sm:$0xff] %v1108
        %1141 = vst [vmem:[#allocation2 + $0x78] sm:$0xff] %v1109
        %1142 = vst [vmem:[#allocation2 + $0x80] sm:$0xff] %v1110
        %1143 = vst [vmem:[#allocation2 + $0x88] sm:$0xff] %v1111
        %1144 = vst [vmem:[#allocation2 + $0x90] sm:$0xff] %v1112
        %1145 = vst [vmem:[#allocation2 + $0x98] sm:$0xff] %v1113
        %1146 = vst [vmem:[#allocation2 + $0xa0] sm:$0xff] %v1114
        %1147 = vst [vmem:[#allocation2 + $0xa8] sm:$0xff] %v1115
        %1148 = vst [vmem:[#allocation2 + $0xb0] sm:$0xff] %v1116
        %1149 = vst [vmem:[#allocation2 + $0xb8] sm:$0xff] %v1117
        %1150 = vst [vmem:[#allocation2 + $0xc0] sm:$0xff] %v1118
        %1151 = vst [vmem:[#allocation2 + $0xc8] sm:$0xff] %v1119
        %1152 = vst [vmem:[#allocation2 + $0xd0] sm:$0xff] %v1120
        %1153 = vst [vmem:[#allocation2 + $0xd8] sm:$0xff] %v1121
        %1154 = vst [vmem:[#allocation2 + $0xe0] sm:$0xff] %v1122
        %1155 = vst [vmem:[#allocation2 + $0xe8] sm:$0xff] %v1123
        %1156 = vst [vmem:[#allocation2 + $0xf0] sm:$0xff] %v1124
        %1157 = vst [vmem:[#allocation2 + $0xf8] sm:$0xff] %v1125
        %p1158 = scmp.eq.s32.totalorder %s27, 1
        // Predicated region
        $region95: #{grace_forward.5} parent=85 // pred_check
          %p1159 = pneg %p1158
        $region96: #{grace_forward.5} parent=85 // pred_check_branch
          %1161 = sbr.rel (%p1159) target = $region98
        $region97: #{grace_forward.5} parent=85 // pred_region
          %v1162 = vld [vmem:[#allocation2] sm:$0xff]
          %v1163 = vld [vmem:[#allocation2 + $0x8] sm:$0xff]
          %v1164 = vld [vmem:[#allocation2 + $0x10] sm:$0xff]
          %v1165 = vld [vmem:[#allocation2 + $0x18] sm:$0xff]
          %v1166 = vld [vmem:[#allocation2 + $0x20] sm:$0xff]
          %v1167 = vld [vmem:[#allocation2 + $0x28] sm:$0xff]
          %v1168 = vld [vmem:[#allocation2 + $0x30] sm:$0xff]
          %v1169 = vld [vmem:[#allocation2 + $0x38] sm:$0xff]
          %v1170 = vld [vmem:[#allocation2 + $0x40] sm:$0xff]
          %v1171 = vld [vmem:[#allocation2 + $0x48] sm:$0xff]
          %v1172 = vld [vmem:[#allocation2 + $0x50] sm:$0xff]
          %v1173 = vld [vmem:[#allocation2 + $0x58] sm:$0xff]
          %v1174 = vld [vmem:[#allocation2 + $0x60] sm:$0xff]
          %v1175 = vld [vmem:[#allocation2 + $0x68] sm:$0xff]
          %v1176 = vld [vmem:[#allocation2 + $0x70] sm:$0xff]
          %v1177 = vld [vmem:[#allocation2 + $0x78] sm:$0xff]
          %v1178 = vld [vmem:[#allocation2 + $0x80] sm:$0xff]
          %v1179 = vld [vmem:[#allocation2 + $0x88] sm:$0xff]
          %v1180 = vld [vmem:[#allocation2 + $0x90] sm:$0xff]
          %v1181 = vld [vmem:[#allocation2 + $0x98] sm:$0xff]
          %v1182 = vld [vmem:[#allocation2 + $0xa0] sm:$0xff]
          %v1183 = vld [vmem:[#allocation2 + $0xa8] sm:$0xff]
          %v1184 = vld [vmem:[#allocation2 + $0xb0] sm:$0xff]
          %v1185 = vld [vmem:[#allocation2 + $0xb8] sm:$0xff]
          %v1186 = vld [vmem:[#allocation2 + $0xc0] sm:$0xff]
          %v1187 = vld [vmem:[#allocation2 + $0xc8] sm:$0xff]
          %v1188 = vld [vmem:[#allocation2 + $0xd0] sm:$0xff]
          %v1189 = vld [vmem:[#allocation2 + $0xd8] sm:$0xff]
          %v1190 = vld [vmem:[#allocation2 + $0xe0] sm:$0xff]
          %v1191 = vld [vmem:[#allocation2 + $0xe8] sm:$0xff]
          %v1192 = vld [vmem:[#allocation2 + $0xf0] sm:$0xff]
          %v1193 = vld [vmem:[#allocation2 + $0xf8] sm:$0xff]
          %v1194 = vld [vmem:[%s3] sm:$0x1]
          %v1196 = vlaneseq
          %v1197 = vshrl.u32 %v1196, 7
          %v1198 = vsub.s32 0, %v1197
          %v1199 = vrot.slane %v1194, %v1198
          %v1201 = vadd.f32 %v1162, %v1199
          %v1202 = vadd.f32 %v1163, %v1199
          %v1203 = vadd.f32 %v1164, %v1199
          %v1204 = vadd.f32 %v1165, %v1199
          %v1205 = vadd.f32 %v1166, %v1199
          %v1206 = vadd.f32 %v1167, %v1199
          %v1207 = vadd.f32 %v1168, %v1199
          %v1208 = vadd.f32 %v1169, %v1199
          %v1209 = vadd.f32 %v1170, %v1199
          %v1210 = vadd.f32 %v1171, %v1199
          %v1211 = vadd.f32 %v1172, %v1199
          %v1212 = vadd.f32 %v1173, %v1199
          %v1213 = vadd.f32 %v1174, %v1199
          %v1214 = vadd.f32 %v1175, %v1199
          %v1215 = vadd.f32 %v1176, %v1199
          %v1216 = vadd.f32 %v1177, %v1199
          %v1217 = vadd.f32 %v1178, %v1199
          %v1218 = vadd.f32 %v1179, %v1199
          %v1219 = vadd.f32 %v1180, %v1199
          %v1220 = vadd.f32 %v1181, %v1199
          %v1221 = vadd.f32 %v1182, %v1199
          %v1222 = vadd.f32 %v1183, %v1199
          %v1223 = vadd.f32 %v1184, %v1199
          %v1224 = vadd.f32 %v1185, %v1199
          %v1225 = vadd.f32 %v1186, %v1199
          %v1226 = vadd.f32 %v1187, %v1199
          %v1227 = vadd.f32 %v1188, %v1199
          %v1228 = vadd.f32 %v1189, %v1199
          %v1229 = vadd.f32 %v1190, %v1199
          %v1230 = vadd.f32 %v1191, %v1199
          %v1231 = vadd.f32 %v1192, %v1199
          %v1232 = vadd.f32 %v1193, %v1199
          %s1233 = sld [smem:[#allocation3]]
          %vm1234 = vcmp.ge.f32.partialorder %v1201, 0.0
          %vm1235 = vcmp.ge.f32.partialorder %v1202, 0.0
          %vm1236 = vcmp.ge.f32.partialorder %v1203, 0.0
          %vm1237 = vcmp.ge.f32.partialorder %v1204, 0.0
          %vm1238 = vcmp.ge.f32.partialorder %v1205, 0.0
          %vm1239 = vcmp.ge.f32.partialorder %v1206, 0.0
          %vm1240 = vcmp.ge.f32.partialorder %v1207, 0.0
          %vm1241 = vcmp.ge.f32.partialorder %v1208, 0.0
          %vm1242 = vcmp.ge.f32.partialorder %v1209, 0.0
          %vm1243 = vcmp.ge.f32.partialorder %v1210, 0.0
          %vm1244 = vcmp.ge.f32.partialorder %v1211, 0.0
          %vm1245 = vcmp.ge.f32.partialorder %v1212, 0.0
          %vm1246 = vcmp.ge.f32.partialorder %v1213, 0.0
          %vm1247 = vcmp.ge.f32.partialorder %v1214, 0.0
          %vm1248 = vcmp.ge.f32.partialorder %v1215, 0.0
          %vm1249 = vcmp.ge.f32.partialorder %v1216, 0.0
          %vm1250 = vcmp.ge.f32.partialorder %v1217, 0.0
          %vm1251 = vcmp.ge.f32.partialorder %v1218, 0.0
          %vm1252 = vcmp.ge.f32.partialorder %v1219, 0.0
          %vm1253 = vcmp.ge.f32.partialorder %v1220, 0.0
          %vm1254 = vcmp.ge.f32.partialorder %v1221, 0.0
          %vm1255 = vcmp.ge.f32.partialorder %v1222, 0.0
          %vm1256 = vcmp.ge.f32.partialorder %v1223, 0.0
          %vm1257 = vcmp.ge.f32.partialorder %v1224, 0.0
          %vm1258 = vcmp.ge.f32.partialorder %v1225, 0.0
          %vm1259 = vcmp.ge.f32.partialorder %v1226, 0.0
          %vm1260 = vcmp.ge.f32.partialorder %v1227, 0.0
          %vm1261 = vcmp.ge.f32.partialorder %v1228, 0.0
          %vm1262 = vcmp.ge.f32.partialorder %v1229, 0.0
          %vm1263 = vcmp.ge.f32.partialorder %v1230, 0.0
          %vm1264 = vcmp.ge.f32.partialorder %v1231, 0.0
          %vm1265 = vcmp.ge.f32.partialorder %v1232, 0.0
          %v1266 = vstv %s1233
          %v1267 = vmul.f32 %v1266, %v1201
          %v1268 = vmul.f32 %v1266, %v1202
          %v1269 = vmul.f32 %v1266, %v1203
          %v1270 = vmul.f32 %v1266, %v1204
          %v1271 = vmul.f32 %v1266, %v1205
          %v1272 = vmul.f32 %v1266, %v1206
          %v1273 = vmul.f32 %v1266, %v1207
          %v1274 = vmul.f32 %v1266, %v1208
          %v1275 = vmul.f32 %v1266, %v1209
          %v1276 = vmul.f32 %v1266, %v1210
          %v1277 = vmul.f32 %v1266, %v1211
          %v1278 = vmul.f32 %v1266, %v1212
          %v1279 = vmul.f32 %v1266, %v1213
          %v1280 = vmul.f32 %v1266, %v1214
          %v1281 = vmul.f32 %v1266, %v1215
          %v1282 = vmul.f32 %v1266, %v1216
          %v1283 = vmul.f32 %v1266, %v1217
          %v1284 = vmul.f32 %v1266, %v1218
          %v1285 = vmul.f32 %v1266, %v1219
          %v1286 = vmul.f32 %v1266, %v1220
          %v1287 = vmul.f32 %v1266, %v1221
          %v1288 = vmul.f32 %v1266, %v1222
          %v1289 = vmul.f32 %v1266, %v1223
          %v1290 = vmul.f32 %v1266, %v1224
          %v1291 = vmul.f32 %v1266, %v1225
          %v1292 = vmul.f32 %v1266, %v1226
          %v1293 = vmul.f32 %v1266, %v1227
          %v1294 = vmul.f32 %v1266, %v1228
          %v1295 = vmul.f32 %v1266, %v1229
          %v1296 = vmul.f32 %v1266, %v1230
          %v1297 = vmul.f32 %v1266, %v1231
          %v1298 = vmul.f32 %v1266, %v1232
          %v1299 = vsel %vm1234, %v1201, %v1267
          %v1300 = vsel %vm1235, %v1202, %v1268
          %v1301 = vsel %vm1236, %v1203, %v1269
          %v1302 = vsel %vm1237, %v1204, %v1270
          %v1303 = vsel %vm1238, %v1205, %v1271
          %v1304 = vsel %vm1239, %v1206, %v1272
          %v1305 = vsel %vm1240, %v1207, %v1273
          %v1306 = vsel %vm1241, %v1208, %v1274
          %v1307 = vsel %vm1242, %v1209, %v1275
          %v1308 = vsel %vm1243, %v1210, %v1276
          %v1309 = vsel %vm1244, %v1211, %v1277
          %v1310 = vsel %vm1245, %v1212, %v1278
          %v1311 = vsel %vm1246, %v1213, %v1279
          %v1312 = vsel %vm1247, %v1214, %v1280
          %v1313 = vsel %vm1248, %v1215, %v1281
          %v1314 = vsel %vm1249, %v1216, %v1282
          %v1315 = vsel %vm1250, %v1217, %v1283
          %v1316 = vsel %vm1251, %v1218, %v1284
          %v1317 = vsel %vm1252, %v1219, %v1285
          %v1318 = vsel %vm1253, %v1220, %v1286
          %v1319 = vsel %vm1254, %v1221, %v1287
          %v1320 = vsel %vm1255, %v1222, %v1288
          %v1321 = vsel %vm1256, %v1223, %v1289
          %v1322 = vsel %vm1257, %v1224, %v1290
          %v1323 = vsel %vm1258, %v1225, %v1291
          %v1324 = vsel %vm1259, %v1226, %v1292
          %v1325 = vsel %vm1260, %v1227, %v1293
          %v1326 = vsel %vm1261, %v1228, %v1294
          %v1327 = vsel %vm1262, %v1229, %v1295
          %v1328 = vsel %vm1263, %v1230, %v1296
          %v1329 = vsel %vm1264, %v1231, %v1297
          %v1330 = vsel %vm1265, %v1232, %v1298
          %v1331 = vpack.c.bf16 %v1300, %v1299
          %v1332 = vpack.c.bf16 %v1302, %v1301
          %v1333 = vpack.c.bf16 %v1304, %v1303
          %v1334 = vpack.c.bf16 %v1306, %v1305
          %v1335 = vpack.c.bf16 %v1308, %v1307
          %v1336 = vpack.c.bf16 %v1310, %v1309
          %v1337 = vpack.c.bf16 %v1312, %v1311
          %v1338 = vpack.c.bf16 %v1314, %v1313
          %v1339 = vpack.c.bf16 %v1316, %v1315
          %v1340 = vpack.c.bf16 %v1318, %v1317
          %v1341 = vpack.c.bf16 %v1320, %v1319
          %v1342 = vpack.c.bf16 %v1322, %v1321
          %v1343 = vpack.c.bf16 %v1324, %v1323
          %v1344 = vpack.c.bf16 %v1326, %v1325
          %v1345 = vpack.c.bf16 %v1328, %v1327
          %v1346 = vpack.c.bf16 %v1330, %v1329
          %v1347 = vld [vmem:[%s4] sm:$0xf]
          %v1348 = vld [vmem:[%s4 + $0x4] sm:$0xf]
          %v1349 = vld [vmem:[%s4 + $0x8] sm:$0xf]
          %v1350 = vld [vmem:[%s4 + $0xc] sm:$0xf]
          %v1351 = vld [vmem:[%s4 + $0x10] sm:$0xf]
          %v1352 = vld [vmem:[%s4 + $0x14] sm:$0xf]
          %v1353 = vld [vmem:[%s4 + $0x18] sm:$0xf]
          %v1354 = vld [vmem:[%s4 + $0x1c] sm:$0xf]
          %v1355 = vld [vmem:[%s4 + $0x20] sm:$0xf]
          %v1356 = vld [vmem:[%s4 + $0x24] sm:$0xf]
          %v1357 = vld [vmem:[%s4 + $0x28] sm:$0xf]
          %v1358 = vld [vmem:[%s4 + $0x2c] sm:$0xf]
          %v1359 = vld [vmem:[%s4 + $0x30] sm:$0xf]
          %v1360 = vld [vmem:[%s4 + $0x34] sm:$0xf]
          %v1361 = vld [vmem:[%s4 + $0x38] sm:$0xf]
          %v1362 = vld [vmem:[%s4 + $0x3c] sm:$0xf]
          %v1363 = vld [vmem:[%s5] sm:$0x1]
          %v1365 = vlaneseq
          %v1366 = vshrl.u32 %v1365, 7
          %v1367 = vsub.s32 0, %v1366
          %v1368 = vrot.slane %v1363, %v1367
          %v1386 = vunpack.c.l.b16 %v1347
          %v1387 = vunpack.c.l.b16 %v1348
          %v1388 = vunpack.c.l.b16 %v1349
          %v1389 = vunpack.c.l.b16 %v1350
          %v1390 = vunpack.c.l.b16 %v1351
          %v1391 = vunpack.c.l.b16 %v1352
          %v1392 = vunpack.c.l.b16 %v1353
          %v1393 = vunpack.c.l.b16 %v1354
          %v1394 = vunpack.c.l.b16 %v1355
          %v1395 = vunpack.c.l.b16 %v1356
          %v1396 = vunpack.c.l.b16 %v1357
          %v1397 = vunpack.c.l.b16 %v1358
          %v1398 = vunpack.c.l.b16 %v1359
          %v1399 = vunpack.c.l.b16 %v1360
          %v1400 = vunpack.c.l.b16 %v1361
          %v1401 = vunpack.c.l.b16 %v1362
          %v1402 = vpack.c.b16 %v1387, %v1386
          %v1403 = vpack.c.b16 %v1389, %v1388
          %v1404 = vpack.c.b16 %v1391, %v1390
          %v1405 = vpack.c.b16 %v1393, %v1392
          %v1406 = vpack.c.b16 %v1395, %v1394
          %v1407 = vpack.c.b16 %v1397, %v1396
          %v1408 = vpack.c.b16 %v1399, %v1398
          %v1409 = vpack.c.b16 %v1401, %v1400
          %1418 = vmatprep.subr.bf16.mxu0 0
          %1419 = vmatpush1.bf16.msra.mxu0 %v1409
          %1420 = vmatprep.subr.bf16.mxu0 0
          %1421 = vmatpush1.bf16.msra.mxu0 %v1408
          %1422 = vmatprep.subr.bf16.mxu0 0
          %1423 = vmatpush1.bf16.msra.mxu0 %v1407
          %1424 = vmatprep.subr.bf16.mxu0 0
          %1425 = vmatpush1.bf16.msra.mxu0 %v1406
          %1426 = vmatprep.subr.bf16.mxu0 0
          %1427 = vmatpush1.bf16.msra.mxu0 %v1405
          %1428 = vmatprep.subr.bf16.mxu0 0
          %1429 = vmatpush1.bf16.msra.mxu0 %v1404
          %1430 = vmatprep.subr.bf16.mxu0 0
          %1431 = vmatpush1.bf16.msra.mxu0 %v1403
          %1432 = vmatprep.subr.bf16.mxu0 0
          %1433 = vmatpush1.bf16.msra.mxu0 %v1402
          %1434 = vmatprep.subr.bf16.mxu0 0
          %1435 = vmatpush2.bf16.msra.mxu0 0
          %1436 = vmatprep.subr.bf16.mxu0 0
          %1437 = vmatpush2.bf16.msra.mxu0 0
          %1438 = vmatprep.subr.bf16.mxu0 0
          %1439 = vmatpush2.bf16.msra.mxu0 0
          %1440 = vmatprep.subr.bf16.mxu0 0
          %1441 = vmatpush2.bf16.msra.mxu0 0
          %1442 = vmatprep.subr.bf16.mxu0 0
          %1443 = vmatpush2.bf16.msra.mxu0 0
          %1444 = vmatprep.subr.bf16.mxu0 0
          %1445 = vmatpush2.bf16.msra.mxu0 0
          %1446 = vmatprep.subr.bf16.mxu0 0
          %1447 = vmatpush2.bf16.msra.mxu0 0
          %1448 = vmatprep.subr.bf16.mxu0 0
          %1449 = vmatpush2.bf16.msra.mxu0 0
          %1450 = vmatprep.mubr.bf16.mxu0 0
          %1451 = vmatmul.mubr.bf16.gmra.mxu0 %v1331
          %v1452 = vpop.f32.mrf.mxu0
          %v1453 = vadd.f32 %v1368, %v1452
          %v1454 = vpop.f32.mrf.mxu0
          %v1455 = vpop.f32.mrf.mxu0
          %v1456 = vadd.f32 %v1368, %v1455
          %v1457 = vpop.f32.mrf.mxu0
          %1458 = vmatprep.mubr.bf16.mxu0 0
          %1459 = vmatmul.mubr.bf16.gmra.mxu0 %v1332
          %v1460 = vpop.f32.mrf.mxu0
          %v1461 = vadd.f32 %v1368, %v1460
          %v1462 = vpop.f32.mrf.mxu0
          %v1463 = vpop.f32.mrf.mxu0
          %v1464 = vadd.f32 %v1368, %v1463
          %v1465 = vpop.f32.mrf.mxu0
          %1466 = vmatprep.mubr.bf16.mxu0 0
          %1467 = vmatmul.mubr.bf16.gmra.mxu0 %v1333
          %v1468 = vpop.f32.mrf.mxu0
          %v1469 = vadd.f32 %v1368, %v1468
          %v1470 = vpop.f32.mrf.mxu0
          %v1471 = vpop.f32.mrf.mxu0
          %v1472 = vadd.f32 %v1368, %v1471
          %v1473 = vpop.f32.mrf.mxu0
          %1474 = vmatprep.mubr.bf16.mxu0 0
          %1475 = vmatmul.mubr.bf16.gmra.mxu0 %v1334
          %v1476 = vpop.f32.mrf.mxu0
          %v1477 = vadd.f32 %v1368, %v1476
          %v1478 = vpop.f32.mrf.mxu0
          %v1479 = vpop.f32.mrf.mxu0
          %v1480 = vadd.f32 %v1368, %v1479
          %v1481 = vpop.f32.mrf.mxu0
          %1482 = vmatprep.mubr.bf16.mxu0 0
          %1483 = vmatmul.mubr.bf16.gmra.mxu0 %v1335
          %v1484 = vpop.f32.mrf.mxu0
          %v1485 = vadd.f32 %v1368, %v1484
          %v1486 = vpop.f32.mrf.mxu0
          %v1487 = vpop.f32.mrf.mxu0
          %v1488 = vadd.f32 %v1368, %v1487
          %v1489 = vpop.f32.mrf.mxu0
          %1490 = vmatprep.mubr.bf16.mxu0 0
          %1491 = vmatmul.mubr.bf16.gmra.mxu0 %v1336
          %v1492 = vpop.f32.mrf.mxu0
          %v1493 = vadd.f32 %v1368, %v1492
          %v1494 = vpop.f32.mrf.mxu0
          %v1495 = vpop.f32.mrf.mxu0
          %v1496 = vadd.f32 %v1368, %v1495
          %v1497 = vpop.f32.mrf.mxu0
          %1498 = vmatprep.mubr.bf16.mxu0 0
          %1499 = vmatmul.mubr.bf16.gmra.mxu0 %v1337
          %v1500 = vpop.f32.mrf.mxu0
          %v1501 = vadd.f32 %v1368, %v1500
          %v1502 = vpop.f32.mrf.mxu0
          %v1503 = vpop.f32.mrf.mxu0
          %v1504 = vadd.f32 %v1368, %v1503
          %v1505 = vpop.f32.mrf.mxu0
          %1506 = vmatprep.mubr.bf16.mxu0 0
          %1507 = vmatmul.mubr.bf16.gmra.mxu0 %v1338
          %v1508 = vpop.f32.mrf.mxu0
          %v1509 = vadd.f32 %v1368, %v1508
          %v1510 = vpop.f32.mrf.mxu0
          %v1511 = vpop.f32.mrf.mxu0
          %v1512 = vadd.f32 %v1368, %v1511
          %v1513 = vpop.f32.mrf.mxu0
          %1514 = vmatprep.mubr.bf16.mxu0 0
          %1515 = vmatmul.mubr.bf16.gmra.mxu0 %v1339
          %v1516 = vpop.f32.mrf.mxu0
          %v1517 = vadd.f32 %v1368, %v1516
          %v1518 = vpop.f32.mrf.mxu0
          %v1519 = vpop.f32.mrf.mxu0
          %v1520 = vadd.f32 %v1368, %v1519
          %v1521 = vpop.f32.mrf.mxu0
          %1522 = vmatprep.mubr.bf16.mxu0 0
          %1523 = vmatmul.mubr.bf16.gmra.mxu0 %v1340
          %v1524 = vpop.f32.mrf.mxu0
          %v1525 = vadd.f32 %v1368, %v1524
          %v1526 = vpop.f32.mrf.mxu0
          %v1527 = vpop.f32.mrf.mxu0
          %v1528 = vadd.f32 %v1368, %v1527
          %v1529 = vpop.f32.mrf.mxu0
          %1530 = vmatprep.mubr.bf16.mxu0 0
          %1531 = vmatmul.mubr.bf16.gmra.mxu0 %v1341
          %v1532 = vpop.f32.mrf.mxu0
          %v1533 = vadd.f32 %v1368, %v1532
          %v1534 = vpop.f32.mrf.mxu0
          %v1535 = vpop.f32.mrf.mxu0
          %v1536 = vadd.f32 %v1368, %v1535
          %v1537 = vpop.f32.mrf.mxu0
          %1538 = vmatprep.mubr.bf16.mxu0 0
          %1539 = vmatmul.mubr.bf16.gmra.mxu0 %v1342
          %v1540 = vpop.f32.mrf.mxu0
          %v1541 = vadd.f32 %v1368, %v1540
          %v1542 = vpop.f32.mrf.mxu0
          %v1543 = vpop.f32.mrf.mxu0
          %v1544 = vadd.f32 %v1368, %v1543
          %v1545 = vpop.f32.mrf.mxu0
          %1546 = vmatprep.mubr.bf16.mxu0 0
          %1547 = vmatmul.mubr.bf16.gmra.mxu0 %v1343
          %v1548 = vpop.f32.mrf.mxu0
          %v1549 = vadd.f32 %v1368, %v1548
          %v1550 = vpop.f32.mrf.mxu0
          %v1551 = vpop.f32.mrf.mxu0
          %v1552 = vadd.f32 %v1368, %v1551
          %v1553 = vpop.f32.mrf.mxu0
          %1554 = vmatprep.mubr.bf16.mxu0 0
          %1555 = vmatmul.mubr.bf16.gmra.mxu0 %v1344
          %v1556 = vpop.f32.mrf.mxu0
          %v1557 = vadd.f32 %v1368, %v1556
          %v1558 = vpop.f32.mrf.mxu0
          %v1559 = vpop.f32.mrf.mxu0
          %v1560 = vadd.f32 %v1368, %v1559
          %v1561 = vpop.f32.mrf.mxu0
          %1562 = vmatprep.mubr.bf16.mxu0 0
          %1563 = vmatmul.mubr.bf16.gmra.mxu0 %v1345
          %v1564 = vpop.f32.mrf.mxu0
          %v1565 = vadd.f32 %v1368, %v1564
          %v1566 = vpop.f32.mrf.mxu0
          %v1567 = vpop.f32.mrf.mxu0
          %v1568 = vadd.f32 %v1368, %v1567
          %v1569 = vpop.f32.mrf.mxu0
          %1570 = vmatprep.mubr.bf16.mxu0 0
          %1571 = vmatmul.mubr.bf16.gmra.mxu0 %v1346
          %v1572 = vpop.f32.mrf.mxu0
          %v1573 = vadd.f32 %v1368, %v1572
          %v1574 = vpop.f32.mrf.mxu0
          %v1575 = vpop.f32.mrf.mxu0
          %v1576 = vadd.f32 %v1368, %v1575
          %v1577 = vpop.f32.mrf.mxu0
          %1578 = vdwg.mxu0
          %v1579 = vmax.f32 %v1453, 0.0
          %v1580 = vmax.f32 %v1456, 0.0
          %v1581 = vmax.f32 %v1461, 0.0
          %v1582 = vmax.f32 %v1464, 0.0
          %v1583 = vmax.f32 %v1469, 0.0
          %v1584 = vmax.f32 %v1472, 0.0
          %v1585 = vmax.f32 %v1477, 0.0
          %v1586 = vmax.f32 %v1480, 0.0
          %v1587 = vmax.f32 %v1485, 0.0
          %v1588 = vmax.f32 %v1488, 0.0
          %v1589 = vmax.f32 %v1493, 0.0
          %v1590 = vmax.f32 %v1496, 0.0
          %v1591 = vmax.f32 %v1501, 0.0
          %v1592 = vmax.f32 %v1504, 0.0
          %v1593 = vmax.f32 %v1509, 0.0
          %v1594 = vmax.f32 %v1512, 0.0
          %v1595 = vmax.f32 %v1517, 0.0
          %v1596 = vmax.f32 %v1520, 0.0
          %v1597 = vmax.f32 %v1525, 0.0
          %v1598 = vmax.f32 %v1528, 0.0
          %v1599 = vmax.f32 %v1533, 0.0
          %v1600 = vmax.f32 %v1536, 0.0
          %v1601 = vmax.f32 %v1541, 0.0
          %v1602 = vmax.f32 %v1544, 0.0
          %v1603 = vmax.f32 %v1549, 0.0
          %v1604 = vmax.f32 %v1552, 0.0
          %v1605 = vmax.f32 %v1557, 0.0
          %v1606 = vmax.f32 %v1560, 0.0
          %v1607 = vmax.f32 %v1565, 0.0
          %v1608 = vmax.f32 %v1568, 0.0
          %v1609 = vmax.f32 %v1573, 0.0
          %v1610 = vmax.f32 %v1576, 0.0
          %v1611 = vpack.c.bf16 %v1580, %v1579
          %v1612 = vpack.c.bf16 %v1582, %v1581
          %v1613 = vpack.c.bf16 %v1584, %v1583
          %v1614 = vpack.c.bf16 %v1586, %v1585
          %v1615 = vpack.c.bf16 %v1588, %v1587
          %v1616 = vpack.c.bf16 %v1590, %v1589
          %v1617 = vpack.c.bf16 %v1592, %v1591
          %v1618 = vpack.c.bf16 %v1594, %v1593
          %v1619 = vpack.c.bf16 %v1596, %v1595
          %v1620 = vpack.c.bf16 %v1598, %v1597
          %v1621 = vpack.c.bf16 %v1600, %v1599
          %v1622 = vpack.c.bf16 %v1602, %v1601
          %v1623 = vpack.c.bf16 %v1604, %v1603
          %v1624 = vpack.c.bf16 %v1606, %v1605
          %v1625 = vpack.c.bf16 %v1608, %v1607
          %v1626 = vpack.c.bf16 %v1610, %v1609
          %v1627 = vld [vmem:[%s6] sm:$0xf]
          %v1628 = vld [vmem:[%s6 + $0x4] sm:$0xf]
          %v1629 = vld [vmem:[%s6 + $0x8] sm:$0xf]
          %v1630 = vld [vmem:[%s6 + $0xc] sm:$0xf]
          %v1631 = vld [vmem:[%s6 + $0x10] sm:$0xf]
          %v1632 = vld [vmem:[%s6 + $0x14] sm:$0xf]
          %v1633 = vld [vmem:[%s6 + $0x18] sm:$0xf]
          %v1634 = vld [vmem:[%s6 + $0x1c] sm:$0xf]
          %v1635 = vld [vmem:[%s6 + $0x20] sm:$0xf]
          %v1636 = vld [vmem:[%s6 + $0x24] sm:$0xf]
          %v1637 = vld [vmem:[%s6 + $0x28] sm:$0xf]
          %v1638 = vld [vmem:[%s6 + $0x2c] sm:$0xf]
          %v1639 = vld [vmem:[%s6 + $0x30] sm:$0xf]
          %v1640 = vld [vmem:[%s6 + $0x34] sm:$0xf]
          %v1641 = vld [vmem:[%s6 + $0x38] sm:$0xf]
          %v1642 = vld [vmem:[%s6 + $0x3c] sm:$0xf]
          %v1643 = vld [vmem:[%s7] sm:$0x1]
          %v1645 = vlaneseq
          %v1646 = vshrl.u32 %v1645, 7
          %v1647 = vsub.s32 0, %v1646
          %v1648 = vrot.slane %v1643, %v1647
          %v1666 = vunpack.c.l.b16 %v1627
          %v1667 = vunpack.c.l.b16 %v1628
          %v1668 = vunpack.c.l.b16 %v1629
          %v1669 = vunpack.c.l.b16 %v1630
          %v1670 = vunpack.c.l.b16 %v1631
          %v1671 = vunpack.c.l.b16 %v1632
          %v1672 = vunpack.c.l.b16 %v1633
          %v1673 = vunpack.c.l.b16 %v1634
          %v1674 = vunpack.c.l.b16 %v1635
          %v1675 = vunpack.c.l.b16 %v1636
          %v1676 = vunpack.c.l.b16 %v1637
          %v1677 = vunpack.c.l.b16 %v1638
          %v1678 = vunpack.c.l.b16 %v1639
          %v1679 = vunpack.c.l.b16 %v1640
          %v1680 = vunpack.c.l.b16 %v1641
          %v1681 = vunpack.c.l.b16 %v1642
          %v1682 = vpack.c.b16 %v1667, %v1666
          %v1683 = vpack.c.b16 %v1669, %v1668
          %v1684 = vpack.c.b16 %v1671, %v1670
          %v1685 = vpack.c.b16 %v1673, %v1672
          %v1686 = vpack.c.b16 %v1675, %v1674
          %v1687 = vpack.c.b16 %v1677, %v1676
          %v1688 = vpack.c.b16 %v1679, %v1678
          %v1689 = vpack.c.b16 %v1681, %v1680
          %1698 = vmatprep.subr.bf16.mxu0 0
          %1699 = vmatpush1.bf16.msra.mxu0 %v1689
          %1700 = vmatprep.subr.bf16.mxu0 0
          %1701 = vmatpush1.bf16.msra.mxu0 %v1688
          %1702 = vmatprep.subr.bf16.mxu0 0
          %1703 = vmatpush1.bf16.msra.mxu0 %v1687
          %1704 = vmatprep.subr.bf16.mxu0 0
          %1705 = vmatpush1.bf16.msra.mxu0 %v1686
          %1706 = vmatprep.subr.bf16.mxu0 0
          %1707 = vmatpush1.bf16.msra.mxu0 %v1685
          %1708 = vmatprep.subr.bf16.mxu0 0
          %1709 = vmatpush1.bf16.msra.mxu0 %v1684
          %1710 = vmatprep.subr.bf16.mxu0 0
          %1711 = vmatpush1.bf16.msra.mxu0 %v1683
          %1712 = vmatprep.subr.bf16.mxu0 0
          %1713 = vmatpush1.bf16.msra.mxu0 %v1682
          %1714 = vmatprep.subr.bf16.mxu0 0
          %1715 = vmatpush2.bf16.msra.mxu0 0
          %1716 = vmatprep.subr.bf16.mxu0 0
          %1717 = vmatpush2.bf16.msra.mxu0 0
          %1718 = vmatprep.subr.bf16.mxu0 0
          %1719 = vmatpush2.bf16.msra.mxu0 0
          %1720 = vmatprep.subr.bf16.mxu0 0
          %1721 = vmatpush2.bf16.msra.mxu0 0
          %1722 = vmatprep.subr.bf16.mxu0 0
          %1723 = vmatpush2.bf16.msra.mxu0 0
          %1724 = vmatprep.subr.bf16.mxu0 0
          %1725 = vmatpush2.bf16.msra.mxu0 0
          %1726 = vmatprep.subr.bf16.mxu0 0
          %1727 = vmatpush2.bf16.msra.mxu0 0
          %1728 = vmatprep.subr.bf16.mxu0 0
          %1729 = vmatpush2.bf16.msra.mxu0 0
          %1730 = vmatprep.mubr.bf16.mxu0 0
          %1731 = vmatmul.mubr.bf16.gmra.mxu0 %v1611
          %v1732 = vpop.f32.mrf.mxu0
          %v1733 = vadd.f32 %v1648, %v1732
          %v1734 = vpop.f32.mrf.mxu0
          %v1735 = vpop.f32.mrf.mxu0
          %v1736 = vadd.f32 %v1648, %v1735
          %v1737 = vpop.f32.mrf.mxu0
          %1738 = vmatprep.mubr.bf16.mxu0 0
          %1739 = vmatmul.mubr.bf16.gmra.mxu0 %v1612
          %v1740 = vpop.f32.mrf.mxu0
          %v1741 = vadd.f32 %v1648, %v1740
          %v1742 = vpop.f32.mrf.mxu0
          %v1743 = vpop.f32.mrf.mxu0
          %v1744 = vadd.f32 %v1648, %v1743
          %v1745 = vpop.f32.mrf.mxu0
          %1746 = vmatprep.mubr.bf16.mxu0 0
          %1747 = vmatmul.mubr.bf16.gmra.mxu0 %v1613
          %v1748 = vpop.f32.mrf.mxu0
          %v1749 = vadd.f32 %v1648, %v1748
          %v1750 = vpop.f32.mrf.mxu0
          %v1751 = vpop.f32.mrf.mxu0
          %v1752 = vadd.f32 %v1648, %v1751
          %v1753 = vpop.f32.mrf.mxu0
          %1754 = vmatprep.mubr.bf16.mxu0 0
          %1755 = vmatmul.mubr.bf16.gmra.mxu0 %v1614
          %v1756 = vpop.f32.mrf.mxu0
          %v1757 = vadd.f32 %v1648, %v1756
          %v1758 = vpop.f32.mrf.mxu0
          %v1759 = vpop.f32.mrf.mxu0
          %v1760 = vadd.f32 %v1648, %v1759
          %v1761 = vpop.f32.mrf.mxu0
          %1762 = vmatprep.mubr.bf16.mxu0 0
          %1763 = vmatmul.mubr.bf16.gmra.mxu0 %v1615
          %v1764 = vpop.f32.mrf.mxu0
          %v1765 = vadd.f32 %v1648, %v1764
          %v1766 = vpop.f32.mrf.mxu0
          %v1767 = vpop.f32.mrf.mxu0
          %v1768 = vadd.f32 %v1648, %v1767
          %v1769 = vpop.f32.mrf.mxu0
          %1770 = vmatprep.mubr.bf16.mxu0 0
          %1771 = vmatmul.mubr.bf16.gmra.mxu0 %v1616
          %v1772 = vpop.f32.mrf.mxu0
          %v1773 = vadd.f32 %v1648, %v1772
          %v1774 = vpop.f32.mrf.mxu0
          %v1775 = vpop.f32.mrf.mxu0
          %v1776 = vadd.f32 %v1648, %v1775
          %v1777 = vpop.f32.mrf.mxu0
          %1778 = vmatprep.mubr.bf16.mxu0 0
          %1779 = vmatmul.mubr.bf16.gmra.mxu0 %v1617
          %v1780 = vpop.f32.mrf.mxu0
          %v1781 = vadd.f32 %v1648, %v1780
          %v1782 = vpop.f32.mrf.mxu0
          %v1783 = vpop.f32.mrf.mxu0
          %v1784 = vadd.f32 %v1648, %v1783
          %v1785 = vpop.f32.mrf.mxu0
          %1786 = vmatprep.mubr.bf16.mxu0 0
          %1787 = vmatmul.mubr.bf16.gmra.mxu0 %v1618
          %v1788 = vpop.f32.mrf.mxu0
          %v1789 = vadd.f32 %v1648, %v1788
          %v1790 = vpop.f32.mrf.mxu0
          %v1791 = vpop.f32.mrf.mxu0
          %v1792 = vadd.f32 %v1648, %v1791
          %v1793 = vpop.f32.mrf.mxu0
          %1794 = vmatprep.mubr.bf16.mxu0 0
          %1795 = vmatmul.mubr.bf16.gmra.mxu0 %v1619
          %v1796 = vpop.f32.mrf.mxu0
          %v1797 = vadd.f32 %v1648, %v1796
          %v1798 = vpop.f32.mrf.mxu0
          %v1799 = vpop.f32.mrf.mxu0
          %v1800 = vadd.f32 %v1648, %v1799
          %v1801 = vpop.f32.mrf.mxu0
          %1802 = vmatprep.mubr.bf16.mxu0 0
          %1803 = vmatmul.mubr.bf16.gmra.mxu0 %v1620
          %v1804 = vpop.f32.mrf.mxu0
          %v1805 = vadd.f32 %v1648, %v1804
          %v1806 = vpop.f32.mrf.mxu0
          %v1807 = vpop.f32.mrf.mxu0
          %v1808 = vadd.f32 %v1648, %v1807
          %v1809 = vpop.f32.mrf.mxu0
          %1810 = vmatprep.mubr.bf16.mxu0 0
          %1811 = vmatmul.mubr.bf16.gmra.mxu0 %v1621
          %v1812 = vpop.f32.mrf.mxu0
          %v1813 = vadd.f32 %v1648, %v1812
          %v1814 = vpop.f32.mrf.mxu0
          %v1815 = vpop.f32.mrf.mxu0
          %v1816 = vadd.f32 %v1648, %v1815
          %v1817 = vpop.f32.mrf.mxu0
          %1818 = vmatprep.mubr.bf16.mxu0 0
          %1819 = vmatmul.mubr.bf16.gmra.mxu0 %v1622
          %v1820 = vpop.f32.mrf.mxu0
          %v1821 = vadd.f32 %v1648, %v1820
          %v1822 = vpop.f32.mrf.mxu0
          %v1823 = vpop.f32.mrf.mxu0
          %v1824 = vadd.f32 %v1648, %v1823
          %v1825 = vpop.f32.mrf.mxu0
          %1826 = vmatprep.mubr.bf16.mxu0 0
          %1827 = vmatmul.mubr.bf16.gmra.mxu0 %v1623
          %v1828 = vpop.f32.mrf.mxu0
          %v1829 = vadd.f32 %v1648, %v1828
          %v1830 = vpop.f32.mrf.mxu0
          %v1831 = vpop.f32.mrf.mxu0
          %v1832 = vadd.f32 %v1648, %v1831
          %v1833 = vpop.f32.mrf.mxu0
          %1834 = vmatprep.mubr.bf16.mxu0 0
          %1835 = vmatmul.mubr.bf16.gmra.mxu0 %v1624
          %v1836 = vpop.f32.mrf.mxu0
          %v1837 = vadd.f32 %v1648, %v1836
          %v1838 = vpop.f32.mrf.mxu0
          %v1839 = vpop.f32.mrf.mxu0
          %v1840 = vadd.f32 %v1648, %v1839
          %v1841 = vpop.f32.mrf.mxu0
          %1842 = vmatprep.mubr.bf16.mxu0 0
          %1843 = vmatmul.mubr.bf16.gmra.mxu0 %v1625
          %v1844 = vpop.f32.mrf.mxu0
          %v1845 = vadd.f32 %v1648, %v1844
          %v1846 = vpop.f32.mrf.mxu0
          %v1847 = vpop.f32.mrf.mxu0
          %v1848 = vadd.f32 %v1648, %v1847
          %v1849 = vpop.f32.mrf.mxu0
          %1850 = vmatprep.mubr.bf16.mxu0 0
          %1851 = vmatmul.mubr.bf16.gmra.mxu0 %v1626
          %v1852 = vpop.f32.mrf.mxu0
          %v1853 = vadd.f32 %v1648, %v1852
          %v1854 = vpop.f32.mrf.mxu0
          %v1855 = vpop.f32.mrf.mxu0
          %v1856 = vadd.f32 %v1648, %v1855
          %v1857 = vpop.f32.mrf.mxu0
          %1858 = vdwg.mxu0
          %1859 = vst [vmem:[%s542] sm:$0xff] %v1733
          %1860 = vst [vmem:[%s542 + $0x8] sm:$0xff] %v1736
          %1861 = vst [vmem:[%s542 + $0x10] sm:$0xff] %v1741
          %1862 = vst [vmem:[%s542 + $0x18] sm:$0xff] %v1744
          %1863 = vst [vmem:[%s542 + $0x20] sm:$0xff] %v1749
          %1864 = vst [vmem:[%s542 + $0x28] sm:$0xff] %v1752
          %1865 = vst [vmem:[%s542 + $0x30] sm:$0xff] %v1757
          %1866 = vst [vmem:[%s542 + $0x38] sm:$0xff] %v1760
          %1867 = vst [vmem:[%s542 + $0x40] sm:$0xff] %v1765
          %1868 = vst [vmem:[%s542 + $0x48] sm:$0xff] %v1768
          %1869 = vst [vmem:[%s542 + $0x50] sm:$0xff] %v1773
          %1870 = vst [vmem:[%s542 + $0x58] sm:$0xff] %v1776
          %1871 = vst [vmem:[%s542 + $0x60] sm:$0xff] %v1781
          %1872 = vst [vmem:[%s542 + $0x68] sm:$0xff] %v1784
          %1873 = vst [vmem:[%s542 + $0x70] sm:$0xff] %v1789
          %1874 = vst [vmem:[%s542 + $0x78] sm:$0xff] %v1792
          %1875 = vst [vmem:[%s542 + $0x80] sm:$0xff] %v1797
          %1876 = vst [vmem:[%s542 + $0x88] sm:$0xff] %v1800
          %1877 = vst [vmem:[%s542 + $0x90] sm:$0xff] %v1805
          %1878 = vst [vmem:[%s542 + $0x98] sm:$0xff] %v1808
          %1879 = vst [vmem:[%s542 + $0xa0] sm:$0xff] %v1813
          %1880 = vst [vmem:[%s542 + $0xa8] sm:$0xff] %v1816
          %1881 = vst [vmem:[%s542 + $0xb0] sm:$0xff] %v1821
          %1882 = vst [vmem:[%s542 + $0xb8] sm:$0xff] %v1824
          %1883 = vst [vmem:[%s542 + $0xc0] sm:$0xff] %v1829
          %1884 = vst [vmem:[%s542 + $0xc8] sm:$0xff] %v1832
          %1885 = vst [vmem:[%s542 + $0xd0] sm:$0xff] %v1837
          %1886 = vst [vmem:[%s542 + $0xd8] sm:$0xff] %v1840
          %1887 = vst [vmem:[%s542 + $0xe0] sm:$0xff] %v1845
          %1888 = vst [vmem:[%s542 + $0xe8] sm:$0xff] %v1848
          %1889 = vst [vmem:[%s542 + $0xf0] sm:$0xff] %v1853
          %1890 = vst [vmem:[%s542 + $0xf8] sm:$0xff] %v1856
        $region98: #{grace_forward.5} parent=85 // pred_fallthru
          _
        %s1891 = smul.u32 32, %s26
        %p1892 = scmp.lt.s32.totalorder %s25, 1
        %s1893 = scalar_select %p1892, %s25, 1
        %p1894 = scmp.lt.s32.totalorder %s1891, 63
        %s1895 = scalar_select %p1894, %s1891, 63
        %s1896 = smul.addr %s1893, 64
        %s1897 = sadd.s32 %s1895, %s1896
        %s1898 = smul.addr %s1897, 8
        %s1899 = scalar_lea.vmem %s8, %s1898
        // Predicated region
        $region99: #{grace_forward.5} parent=85 // pred_check
          %p1900 = pneg %p243
        $region100: #{grace_forward.5} parent=85 // pred_check_branch
          %1902 = sbr.rel (%p1900) target = $region102
        $region101: #{grace_forward.5} parent=85 // pred_region
          %s1903 = smul.u32 32, %s26
        $region102: #{grace_forward.5} parent=85 // pred_fallthru
          _
      $region86: #{grace_forward.5} parent=5 // pred_fallthru
        _
      %p1904 = scmp.le.s32.totalorder 2, %s15
      // Predicated region
      $region103: #{grace_forward.5} parent=5 // pred_check
        %p1905 = pneg %p1904
      $region104: #{grace_forward.5} parent=5 // pred_check_branch
        %1907 = sbr.rel (%p1905) target = $region106
      $region105: #{grace_forward.5} parent=5 // pred_region
        %s1908 = ssub.s32 %s15, 2
        // Predicated region
        $region107: #{grace_forward.5} parent=105 // pred_check
          %p1909 = pneg %p249
        $region108: #{grace_forward.5} parent=105 // pred_check_branch
          %1911 = sbr.rel (%p1909) target = $region110
        $region109: #{grace_forward.5} parent=105 // pred_region
          %s1912 = smul.u32 32, %s29
          %p1913 = scmp.lt.s32.totalorder %s28, 1
          %s1914 = scalar_select %p1913, %s28, 1
          %p1915 = scmp.lt.s32.totalorder %s1912, 63
          %s1916 = scalar_select %p1915, %s1912, 63
          %s1917 = smul.addr %s1914, 64
          %s1918 = sadd.s32 %s1916, %s1917
          %s1919 = smul.addr %s1918, 8
          %s1920 = scalar_lea.vmem %s8, %s1919
        $region110: #{grace_forward.5} parent=105 // pred_fallthru
          _
      $region106: #{grace_forward.5} parent=5 // pred_fallthru
        _
    $region6: #{grace_forward.5} parent=1 // loop_footer
      %s19 = sadd.s32 1, %s15
    $region7: #{grace_forward.5} parent=1 // loop_footer_branch
      %14 = sbr.rel target = $region3
    $region8: #{grace_forward.5} parent=1 // loop_exit
      _

</llo_original>
